<compile_context>
chip_gen: v5e
topology: v5e:2x2
jax: 0.10.0
libtpu: 0.0.40
codegen_flags: <defaults>
</compile_context>

<pallas_src>
import functools
import math

import jax
import jax.numpy as jnp
from jax.experimental import pallas as pl
from jax.experimental.pallas import tpu as pltpu


def _round_up(x, m):
    return ((x + m - 1) // m) * m


# ----------------------------- fused kernel ---------------------------------
def _decoder_kernel(ids_ref, emb_ref, h0_ref, c0_ref, wih_ref, whh_ref,
                    b_ref, wout_ref, bout_ref,
                    logits_ref, hN_ref, cN_ref, xp_sc):
    """Embedding + LSTM (T steps, unrolled) + output Linear, all in VMEM."""
    TB = ids_ref.shape[0]                     # T * Bp
    Bp, Hp = h0_ref.shape                     # batch padded to 8, hidden padded to 128
    T = TB // Bp
    V = emb_ref.shape[0]
    wdt = wih_ref.dtype                       # bf16

    # --- embedding lookup as one-hot @ table (vectorized gather on the MXU) ---
    ids = ids_ref[...]                                            # (TB, 1) i32
    iota = jax.lax.broadcasted_iota(jnp.int32, (TB, V), 1)
    one_hot = jnp.where(iota == ids, 1.0, 0.0).astype(wdt)        # (TB, V)
    x_all = jnp.dot(one_hot, emb_ref[...],
                    preferred_element_type=jnp.float32)           # (TB, E) f32
    # TODO(synk): dropout(p=0.5) on embeddings -> eval-mode identity.

    # --- input projection for every timestep in a single MXU pass ---
    xp_sc[...] = (jnp.dot(x_all.astype(wdt), wih_ref[...],
                          preferred_element_type=jnp.float32)
                  + b_ref[...])                                   # (TB, 4*Hp) f32

    whh = whh_ref[...]                                            # (Hp, 4*Hp) bf16

    def step(t, carry):
        h, c = carry                                              # (Bp, Hp) f32
        x_proj = xp_sc[pl.ds(t * Bp, Bp), :]                      # (Bp, 4*Hp)
        gates = x_proj + jnp.dot(h.astype(wdt), whh,
                                 preferred_element_type=jnp.float32)
        # PyTorch gate order (i, f, g, o); each gate is a full 128-lane slab.
        i_g = jax.nn.sigmoid(gates[:, 0 * Hp:1 * Hp])
        f_g = jax.nn.sigmoid(gates[:, 1 * Hp:2 * Hp])
        g_g = jnp.tanh(gates[:, 2 * Hp:3 * Hp])
        o_g = jax.nn.sigmoid(gates[:, 3 * Hp:4 * Hp])
        c_new = f_g * c + i_g * g_g
        h_new = o_g * jnp.tanh(c_new)
        return h_new, c_new

    hT, cT = jax.lax.fori_loop(0, T, step, (h0_ref[...], c0_ref[...]),
                               unroll=True)

    hN_ref[...] = hT
    cN_ref[...] = cT
    # --- fused output Linear on the final hidden state ---
    # TODO(synk): dropout(p=0.5) on h_T -> eval-mode identity.
    logits_ref[...] = (jnp.dot(hT.astype(wdt), wout_ref[...],
                               preferred_element_type=jnp.float32)
                       + bout_ref[...])


def _decoder_forward(ids2, emb, h0p, c0p, wih, whh, bias, wout, bout):
    """ids2: (T*Bp,1) i32; emb: (V,E) bf16; h0p/c0p: (Bp,Hp) f32;
    wih: (E,4Hp) bf16; whh: (Hp,4Hp) bf16; bias: (1,4Hp) f32;
    wout: (Hp,Vp) bf16; bout: (1,Vp) f32."""
    TB = ids2.shape[0]
    Bp, Hp = h0p.shape
    Hp4 = wih.shape[1]
    Vp = wout.shape[1]

    def full2d(shape):
        return pl.BlockSpec(shape, lambda: (0, 0))

    return pl.pallas_call(
        _decoder_kernel,
        out_shape=(
            jax.ShapeDtypeStruct((Bp, Vp), jnp.float32),    # logits (padded)
            jax.ShapeDtypeStruct((Bp, Hp), jnp.float32),    # h_T (padded)
            jax.ShapeDtypeStruct((Bp, Hp), jnp.float32),    # c_T (padded)
        ),
        in_specs=[
            full2d(ids2.shape), full2d(emb.shape),
            full2d(h0p.shape), full2d(c0p.shape),
            full2d(wih.shape), full2d(whh.shape), full2d(bias.shape),
            full2d(wout.shape), full2d(bout.shape),
        ],
        out_specs=(full2d((Bp, Vp)), full2d((Bp, Hp)), full2d((Bp, Hp))),
        scratch_shapes=[pltpu.VMEM((TB, Hp4), jnp.float32)],
    )(ids2, emb, h0p, c0p, wih, whh, bias, wout, bout)


# ----------------------------- module wrapper --------------------------------
class DecoderRNN:
    def __init__(self, embed_size, hidden_size, output_size, key):
        self.embed_size = embed_size
        self.hidden_size = hidden_size
        self.output_size = output_size
        self.dropout_rate = 0.5

        H, E, V = hidden_size, embed_size, output_size
        Hp = _round_up(H, 128)
        Vp = _round_up(V, 128)
        self.Hp, self.Vp = Hp, Vp

        ks = jax.random.split(key, 7)
        s = 1.0 / math.sqrt(H)

        # Raw parameters (PyTorch default inits), kept in f32 for reference.
        self.embedding = jax.random.normal(ks[0], (V, E), jnp.float32)
        self.w_ih_t = jax.random.uniform(ks[1], (E, 4 * H), jnp.float32, -s, s)
        self.w_hh_t = jax.random.uniform(ks[2], (H, 4 * H), jnp.float32, -s, s)
        b_ih = jax.random.uniform(ks[3], (4 * H,), jnp.float32, -s, s)
        b_hh = jax.random.uniform(ks[4], (4 * H,), jnp.float32, -s, s)
        self.lstm_bias = (b_ih + b_hh).reshape(1, 4 * H)
        self.w_out_t = jax.random.uniform(ks[5], (H, V), jnp.float32, -s, s)
        self.b_out = jax.random.uniform(ks[6], (1, V), jnp.float32, -s, s)

        # Kernel-side parameters: each gate gets its own 128-lane slab; weights
        # in bf16 (MXU native), biases stay f32 (added to f32 accumulators).
        def pad_gates(w):   # (rows, 4H) -> (rows, 4Hp), zero padding per gate
            rows = w.shape[0]
            out = jnp.zeros((rows, 4 * Hp), w.dtype)
            for g in range(4):
                out = out.at[:, g * Hp:g * Hp + H].set(w[:, g * H:(g + 1) * H])
            return out

        self.k_emb = self.embedding.astype(jnp.bfloat16)                   # (V, E)
        self.k_wih = pad_gates(self.w_ih_t).astype(jnp.bfloat16)           # (E, 4Hp)
        self.k_whh = (jnp.zeros((Hp, 4 * Hp), jnp.float32)
                      .at[:H, :].set(pad_gates(self.w_hh_t))
                      .astype(jnp.bfloat16))                               # (Hp, 4Hp)
        self.k_bias = pad_gates(self.lstm_bias)                            # (1, 4Hp)
        self.k_wout = (jnp.zeros((Hp, Vp), jnp.float32)
                       .at[:H, :V].set(self.w_out_t)
                       .astype(jnp.bfloat16))                              # (Hp, Vp)
        self.k_bout = jnp.zeros((1, Vp), jnp.float32).at[:, :V].set(self.b_out)

    @functools.partial(jax.jit, static_argnums=0)
    def forward(self, hidden, output):
        """flag=0 path. hidden: (h0, c0) each (1,B,H); output: (T,B) int ids.
        Returns (logits (1,B,V), (h_T (1,B,H), c_T (1,B,H)))."""
        # TODO(synk): flag==1 packed-sequence path not implemented.
        h0, c0 = hidden
        T, B = output.shape
        H, V = self.hidden_size, self.output_size
        Hp, Vp = self.Hp, self.Vp
        Bp = _round_up(B, 8)

        ids = jnp.pad(output.astype(jnp.int32), ((0, 0), (0, Bp - B)))
        ids2 = ids.reshape(T * Bp, 1)
        h0p = jnp.zeros((Bp, Hp), jnp.float32).at[:B, :H].set(h0[0])
        c0p = jnp.zeros((Bp, Hp), jnp.float32).at[:B, :H].set(c0[0])

        logits_p, hNp, cNp = _decoder_forward(
            ids2, self.k_emb, h0p, c0p, self.k_wih, self.k_whh, self.k_bias,
            self.k_wout, self.k_bout)

        logits = logits_p[:B, :V][None]
        hN = hNp[:B, :H][None]
        cN = cNp[:B, :H][None]
        return logits, (hN, cN)


# --------------------------- pure-JAX reference ------------------------------
def _reference_forward(model, hidden, output):
    h0, c0 = hidden
    emb = jnp.take(model.embedding, output, axis=0)          # (T, B, E)
    H = model.hidden_size

    def step(carry, x_t):
        h, c = carry
        gates = x_t @ model.w_ih_t + h @ model.w_hh_t + model.lstm_bias
        i = jax.nn.sigmoid(gates[:, 0 * H:1 * H])
        f = jax.nn.sigmoid(gates[:, 1 * H:2 * H])
        g = jnp.tanh(gates[:, 2 * H:3 * H])
        o = jax.nn.sigmoid(gates[:, 3 * H:4 * H])
        c = f * c + i * g
        h = o * jnp.tanh(c)
        return (h, c), None

    (hT, cT), _ = jax.lax.scan(step, (h0[0], c0[0]), emb)
    logits = hT @ model.w_out_t + model.b_out
    return logits[None], (hT[None], cT[None])


# --------------------------------- main ---------------------------------------
if __name__ == "__main__":
    embed_size, hidden_size, output_size = 32, 32, 64
    T, B = 8, 4

    key = jax.random.PRNGKey(0)
    k_param, k_tok, k_h, k_c = jax.random.split(key, 4)

    model = DecoderRNN(embed_size, hidden_size, output_size, k_param)

    tokens = jax.random.randint(k_tok, (T, B), 0, output_size, jnp.int32)
    h0 = jax.random.normal(k_h, (1, B, hidden_size), jnp.float32)
    c0 = jax.random.normal(k_c, (1, B, hidden_size), jnp.float32)

    logits, (hN, cN) = model.forward((h0, c0), tokens)
    jax.block_until_ready((logits, hN, cN))

    assert logits.shape == (1, B, output_size)
    assert hN.shape == (1, B, hidden_size)
    assert cN.shape == (1, B, hidden_size)

    # Sanity check vs. pure-JAX f32 reference (bf16 kernel weights -> loose tol).
    ref_logits, (ref_h, ref_c) = _reference_forward(model, (h0, c0), tokens)
    for got, ref in ((logits, ref_logits), (hN, ref_h), (cN, ref_c)):
        err = float(jnp.max(jnp.abs(got - ref)))
        assert err < 5e-2, f"max abs err {err}"

    print("KERNEL_OK")
</pallas_src>

<mosaic_0001>
module attributes {stable_mosaic.version = 11 : i64} {
  func.func @_decoder_kernel(%arg0: memref<64x1xi32, #tpu.memory_space<vmem>>, %arg1: memref<64x32xbf16, #tpu.memory_space<vmem>>, %arg2: memref<8x128xf32, #tpu.memory_space<vmem>>, %arg3: memref<8x128xf32, #tpu.memory_space<vmem>>, %arg4: memref<32x512xbf16, #tpu.memory_space<vmem>>, %arg5: memref<128x512xbf16, #tpu.memory_space<vmem>>, %arg6: memref<1x512xf32, #tpu.memory_space<vmem>>, %arg7: memref<128x128xbf16, #tpu.memory_space<vmem>>, %arg8: memref<1x128xf32, #tpu.memory_space<vmem>>, %arg9: memref<8x128xf32, #tpu.memory_space<vmem>>, %arg10: memref<8x128xf32, #tpu.memory_space<vmem>>, %arg11: memref<8x128xf32, #tpu.memory_space<vmem>>, %arg12: memref<64x512xf32, #tpu.memory_space<vmem>>) attributes {dimension_semantics = [], scalar_prefetch = 0 : i64, scratch_operands = 1 : i64, tpu.core_type = #tpu.core_type<tc>} {
    %c0 = arith.constant 0 : index
    %c0_0 = arith.constant 0 : index
    %0 = vector.load %arg0[%c0, %c0_0] : memref<64x1xi32, #tpu.memory_space<vmem>>, vector<64x1xi32>
    %1 = tpu.iota {dimensions = array<i32: 1>} : vector<64x64xi32>
    %2 = vector.broadcast %0 : vector<64x1xi32> to vector<64x64xi32>
    %3 = arith.cmpi eq, %1, %2 : vector<64x64xi32>
    %cst = arith.constant 1.000000e+00 : f32
    %cst_1 = arith.constant 0.000000e+00 : f32
    %4 = vector.broadcast %cst : f32 to vector<64x64xf32>
    %5 = vector.broadcast %cst_1 : f32 to vector<64x64xf32>
    %6 = arith.select %3, %4, %5 : vector<64x64xi1>, vector<64x64xf32>
    %7 = arith.truncf %6 : vector<64x64xf32> to vector<64x64xbf16>
    %c0_2 = arith.constant 0 : index
    %c0_3 = arith.constant 0 : index
    %8 = vector.load %arg1[%c0_2, %c0_3] : memref<64x32xbf16, #tpu.memory_space<vmem>>, vector<64x32xbf16>
    %cst_4 = arith.constant dense<0.000000e+00> : vector<64x32xf32>
    %9 = tpu.matmul %7, %8, %cst_4 {dimension_numbers = #tpu.dot_dimension_numbers<[1], [0], [0], [1], [0, 0, 1, 1], [], []>} : vector<64x64xbf16>, vector<64x32xbf16>, vector<64x32xf32> -> vector<64x32xf32>
    %10 = arith.truncf %9 : vector<64x32xf32> to vector<64x32xbf16>
    %c0_5 = arith.constant 0 : index
    %c0_6 = arith.constant 0 : index
    %11 = vector.load %arg4[%c0_5, %c0_6] : memref<32x512xbf16, #tpu.memory_space<vmem>>, vector<32x512xbf16>
    %cst_7 = arith.constant dense<0.000000e+00> : vector<64x512xf32>
    %12 = tpu.matmul %10, %11, %cst_7 {dimension_numbers = #tpu.dot_dimension_numbers<[1], [0], [0], [1], [0, 0, 1, 1], [], []>} : vector<64x32xbf16>, vector<32x512xbf16>, vector<64x512xf32> -> vector<64x512xf32>
    %c0_8 = arith.constant 0 : index
    %c0_9 = arith.constant 0 : index
    %13 = vector.load %arg6[%c0_8, %c0_9] : memref<1x512xf32, #tpu.memory_space<vmem>>, vector<1x512xf32>
    %14 = vector.broadcast %13 : vector<1x512xf32> to vector<64x512xf32>
    %15 = arith.addf %12, %14 : vector<64x512xf32>
    %c0_10 = arith.constant 0 : index
    %c0_11 = arith.constant 0 : index
    %16 = vector.load %arg12[%c0_10, %c0_11] : memref<64x512xf32, #tpu.memory_space<vmem>>, vector<64x512xf32>
    tpu.vector_store %arg12[%c0_10, %c0_11], %15 {strides = array<i32>} : memref<64x512xf32, #tpu.memory_space<vmem>>, vector<64x512xf32>,
    %c0_12 = arith.constant 0 : index
    %c0_13 = arith.constant 0 : index
    %17 = vector.load %arg5[%c0_12, %c0_13] : memref<128x512xbf16, #tpu.memory_space<vmem>>, vector<128x512xbf16>
    %c0_14 = arith.constant 0 : index
    %c0_15 = arith.constant 0 : index
    %18 = vector.load %arg2[%c0_14, %c0_15] : memref<8x128xf32, #tpu.memory_space<vmem>>, vector<8x128xf32>
    %c0_16 = arith.constant 0 : index
    %c0_17 = arith.constant 0 : index
    %19 = vector.load %arg3[%c0_16, %c0_17] : memref<8x128xf32, #tpu.memory_space<vmem>>, vector<8x128xf32>
    %c0_i32 = arith.constant 0 : i32
    %c8_i32 = arith.constant 8 : i32
    %20 = arith.muli %c0_i32, %c8_i32 : i32
    %21 = arith.index_cast %20 : i32 to index
    %c0_18 = arith.constant 0 : index
    %22 = vector.load %arg12[%21, %c0_18] : memref<64x512xf32, #tpu.memory_space<vmem>>, vector<8x512xf32>
    %23 = arith.truncf %18 : vector<8x128xf32> to vector<8x128xbf16>
    %cst_19 = arith.constant dense<0.000000e+00> : vector<8x512xf32>
    %24 = tpu.matmul %23, %17, %cst_19 {dimension_numbers = #tpu.dot_dimension_numbers<[1], [0], [0], [1], [0, 0, 1, 1], [], []>} : vector<8x128xbf16>, vector<128x512xbf16>, vector<8x512xf32> -> vector<8x512xf32>
    %25 = arith.addf %22, %24 : vector<8x512xf32>
    %26 = vector.extract_strided_slice %25 {offsets = [0, 0], sizes = [8, 128], strides = [1, 1]} : vector<8x512xf32> to vector<8x128xf32>
    %27 = arith.negf %26 : vector<8x128xf32>
    %28 = math.exp %27 : vector<8x128xf32>
    %cst_20 = arith.constant 1.000000e+00 : f32
    %29 = vector.broadcast %cst_20 : f32 to vector<8x128xf32>
    %30 = arith.addf %29, %28 : vector<8x128xf32>
    %31 = arith.divf %29, %30 : vector<8x128xf32>
    %32 = vector.extract_strided_slice %25 {offsets = [0, 128], sizes = [8, 128], strides = [1, 1]} : vector<8x512xf32> to vector<8x128xf32>
    %33 = arith.negf %32 : vector<8x128xf32>
    %34 = math.exp %33 : vector<8x128xf32>
    %cst_21 = arith.constant 1.000000e+00 : f32
    %35 = vector.broadcast %cst_21 : f32 to vector<8x128xf32>
    %36 = arith.addf %35, %34 : vector<8x128xf32>
    %37 = arith.divf %35, %36 : vector<8x128xf32>
    %38 = vector.extract_strided_slice %25 {offsets = [0, 256], sizes = [8, 128], strides = [1, 1]} : vector<8x512xf32> to vector<8x128xf32>
    %39 = math.tanh %38 : vector<8x128xf32>
    %40 = vector.extract_strided_slice %25 {offsets = [0, 384], sizes = [8, 128], strides = [1, 1]} : vector<8x512xf32> to vector<8x128xf32>
    %41 = arith.negf %40 : vector<8x128xf32>
    %42 = math.exp %41 : vector<8x128xf32>
    %cst_22 = arith.constant 1.000000e+00 : f32
    %43 = vector.broadcast %cst_22 : f32 to vector<8x128xf32>
    %44 = arith.addf %43, %42 : vector<8x128xf32>
    %45 = arith.divf %43, %44 : vector<8x128xf32>
    %46 = arith.mulf %37, %19 : vector<8x128xf32>
    %47 = arith.mulf %31, %39 : vector<8x128xf32>
    %48 = arith.addf %46, %47 : vector<8x128xf32>
    %49 = math.tanh %48 : vector<8x128xf32>
    %50 = arith.mulf %45, %49 : vector<8x128xf32>
    %c1_i32 = arith.constant 1 : i32
    %c8_i32_23 = arith.constant 8 : i32
    %51 = arith.muli %c1_i32, %c8_i32_23 : i32
    %52 = arith.index_cast %51 : i32 to index
    %c0_24 = arith.constant 0 : index
    %53 = vector.load %arg12[%52, %c0_24] : memref<64x512xf32, #tpu.memory_space<vmem>>, vector<8x512xf32>
    %54 = arith.truncf %50 : vector<8x128xf32> to vector<8x128xbf16>
    %cst_25 = arith.constant dense<0.000000e+00> : vector<8x512xf32>
    %55 = tpu.matmul %54, %17, %cst_25 {dimension_numbers = #tpu.dot_dimension_numbers<[1], [0], [0], [1], [0, 0, 1, 1], [], []>} : vector<8x128xbf16>, vector<128x512xbf16>, vector<8x512xf32> -> vector<8x512xf32>
    %56 = arith.addf %53, %55 : vector<8x512xf32>
    %57 = vector.extract_strided_slice %56 {offsets = [0, 0], sizes = [8, 128], strides = [1, 1]} : vector<8x512xf32> to vector<8x128xf32>
    %58 = arith.negf %57 : vector<8x128xf32>
    %59 = math.exp %58 : vector<8x128xf32>
    %cst_26 = arith.constant 1.000000e+00 : f32
    %60 = vector.broadcast %cst_26 : f32 to vector<8x128xf32>
    %61 = arith.addf %60, %59 : vector<8x128xf32>
    %62 = arith.divf %60, %61 : vector<8x128xf32>
    %63 = vector.extract_strided_slice %56 {offsets = [0, 128], sizes = [8, 128], strides = [1, 1]} : vector<8x512xf32> to vector<8x128xf32>
    %64 = arith.negf %63 : vector<8x128xf32>
    %65 = math.exp %64 : vector<8x128xf32>
    %cst_27 = arith.constant 1.000000e+00 : f32
    %66 = vector.broadcast %cst_27 : f32 to vector<8x128xf32>
    %67 = arith.addf %66, %65 : vector<8x128xf32>
    %68 = arith.divf %66, %67 : vector<8x128xf32>
    %69 = vector.extract_strided_slice %56 {offsets = [0, 256], sizes = [8, 128], strides = [1, 1]} : vector<8x512xf32> to vector<8x128xf32>
    %70 = math.tanh %69 : vector<8x128xf32>
    %71 = vector.extract_strided_slice %56 {offsets = [0, 384], sizes = [8, 128], strides = [1, 1]} : vector<8x512xf32> to vector<8x128xf32>
    %72 = arith.negf %71 : vector<8x128xf32>
    %73 = math.exp %72 : vector<8x128xf32>
    %cst_28 = arith.constant 1.000000e+00 : f32
    %74 = vector.broadcast %cst_28 : f32 to vector<8x128xf32>
    %75 = arith.addf %74, %73 : vector<8x128xf32>
    %76 = arith.divf %74, %75 : vector<8x128xf32>
    %77 = arith.mulf %68, %48 : vector<8x128xf32>
    %78 = arith.mulf %62, %70 : vector<8x128xf32>
    %79 = arith.addf %77, %78 : vector<8x128xf32>
    %80 = math.tanh %79 : vector<8x128xf32>
    %81 = arith.mulf %76, %80 : vector<8x128xf32>
    %c2_i32 = arith.constant 2 : i32
    %c8_i32_29 = arith.constant 8 : i32
    %82 = arith.muli %c2_i32, %c8_i32_29 : i32
    %83 = arith.index_cast %82 : i32 to index
    %c0_30 = arith.constant 0 : index
    %84 = vector.load %arg12[%83, %c0_30] : memref<64x512xf32, #tpu.memory_space<vmem>>, vector<8x512xf32>
    %85 = arith.truncf %81 : vector<8x128xf32> to vector<8x128xbf16>
    %cst_31 = arith.constant dense<0.000000e+00> : vector<8x512xf32>
    %86 = tpu.matmul %85, %17, %cst_31 {dimension_numbers = #tpu.dot_dimension_numbers<[1], [0], [0], [1], [0, 0, 1, 1], [], []>} : vector<8x128xbf16>, vector<128x512xbf16>, vector<8x512xf32> -> vector<8x512xf32>
    %87 = arith.addf %84, %86 : vector<8x512xf32>
    %88 = vector.extract_strided_slice %87 {offsets = [0, 0], sizes = [8, 128], strides = [1, 1]} : vector<8x512xf32> to vector<8x128xf32>
    %89 = arith.negf %88 : vector<8x128xf32>
    %90 = math.exp %89 : vector<8x128xf32>
    %cst_32 = arith.constant 1.000000e+00 : f32
    %91 = vector.broadcast %cst_32 : f32 to vector<8x128xf32>
    %92 = arith.addf %91, %90 : vector<8x128xf32>
    %93 = arith.divf %91, %92 : vector<8x128xf32>
    %94 = vector.extract_strided_slice %87 {offsets = [0, 128], sizes = [8, 128], strides = [1, 1]} : vector<8x512xf32> to vector<8x128xf32>
    %95 = arith.negf %94 : vector<8x128xf32>
    %96 = math.exp %95 : vector<8x128xf32>
    %cst_33 = arith.constant 1.000000e+00 : f32
    %97 = vector.broadcast %cst_33 : f32 to vector<8x128xf32>
    %98 = arith.addf %97, %96 : vector<8x128xf32>
    %99 = arith.divf %97, %98 : vector<8x128xf32>
    %100 = vector.extract_strided_slice %87 {offsets = [0, 256], sizes = [8, 128], strides = [1, 1]} : vector<8x512xf32> to vector<8x128xf32>
    %101 = math.tanh %100 : vector<8x128xf32>
    %102 = vector.extract_strided_slice %87 {offsets = [0, 384], sizes = [8, 128], strides = [1, 1]} : vector<8x512xf32> to vector<8x128xf32>
    %103 = arith.negf %102 : vector<8x128xf32>
    %104 = math.exp %103 : vector<8x128xf32>
    %cst_34 = arith.constant 1.000000e+00 : f32
    %105 = vector.broadcast %cst_34 : f32 to vector<8x128xf32>
    %106 = arith.addf %105, %104 : vector<8x128xf32>
    %107 = arith.divf %105, %106 : vector<8x128xf32>
    %108 = arith.mulf %99, %79 : vector<8x128xf32>
    %109 = arith.mulf %93, %101 : vector<8x128xf32>
    %110 = arith.addf %108, %109 : vector<8x128xf32>
    %111 = math.tanh %110 : vector<8x128xf32>
    %112 = arith.mulf %107, %111 : vector<8x128xf32>
    %c3_i32 = arith.constant 3 : i32
    %c8_i32_35 = arith.constant 8 : i32
    %113 = arith.muli %c3_i32, %c8_i32_35 : i32
    %114 = arith.index_cast %113 : i32 to index
    %c0_36 = arith.constant 0 : index
    %115 = vector.load %arg12[%114, %c0_36] : memref<64x512xf32, #tpu.memory_space<vmem>>, vector<8x512xf32>
    %116 = arith.truncf %112 : vector<8x128xf32> to vector<8x128xbf16>
    %cst_37 = arith.constant dense<0.000000e+00> : vector<8x512xf32>
    %117 = tpu.matmul %116, %17, %cst_37 {dimension_numbers = #tpu.dot_dimension_numbers<[1], [0], [0], [1], [0, 0, 1, 1], [], []>} : vector<8x128xbf16>, vector<128x512xbf16>, vector<8x512xf32> -> vector<8x512xf32>
    %118 = arith.addf %115, %117 : vector<8x512xf32>
    %119 = vector.extract_strided_slice %118 {offsets = [0, 0], sizes = [8, 128], strides = [1, 1]} : vector<8x512xf32> to vector<8x128xf32>
    %120 = arith.negf %119 : vector<8x128xf32>
    %121 = math.exp %120 : vector<8x128xf32>
    %cst_38 = arith.constant 1.000000e+00 : f32
    %122 = vector.broadcast %cst_38 : f32 to vector<8x128xf32>
    %123 = arith.addf %122, %121 : vector<8x128xf32>
    %124 = arith.divf %122, %123 : vector<8x128xf32>
    %125 = vector.extract_strided_slice %118 {offsets = [0, 128], sizes = [8, 128], strides = [1, 1]} : vector<8x512xf32> to vector<8x128xf32>
    %126 = arith.negf %125 : vector<8x128xf32>
    %127 = math.exp %126 : vector<8x128xf32>
    %cst_39 = arith.constant 1.000000e+00 : f32
    %128 = vector.broadcast %cst_39 : f32 to vector<8x128xf32>
    %129 = arith.addf %128, %127 : vector<8x128xf32>
    %130 = arith.divf %128, %129 : vector<8x128xf32>
    %131 = vector.extract_strided_slice %118 {offsets = [0, 256], sizes = [8, 128], strides = [1, 1]} : vector<8x512xf32> to vector<8x128xf32>
    %132 = math.tanh %131 : vector<8x128xf32>
    %133 = vector.extract_strided_slice %118 {offsets = [0, 384], sizes = [8, 128], strides = [1, 1]} : vector<8x512xf32> to vector<8x128xf32>
    %134 = arith.negf %133 : vector<8x128xf32>
    %135 = math.exp %134 : vector<8x128xf32>
    %cst_40 = arith.constant 1.000000e+00 : f32
    %136 = vector.broadcast %cst_40 : f32 to vector<8x128xf32>
    %137 = arith.addf %136, %135 : vector<8x128xf32>
    %138 = arith.divf %136, %137 : vector<8x128xf32>
    %139 = arith.mulf %130, %110 : vector<8x128xf32>
    %140 = arith.mulf %124, %132 : vector<8x128xf32>
    %141 = arith.addf %139, %140 : vector<8x128xf32>
    %142 = math.tanh %141 : vector<8x128xf32>
    %143 = arith.mulf %138, %142 : vector<8x128xf32>
    %c4_i32 = arith.constant 4 : i32
    %c8_i32_41 = arith.constant 8 : i32
    %144 = arith.muli %c4_i32, %c8_i32_41 : i32
    %145 = arith.index_cast %144 : i32 to index
    %c0_42 = arith.constant 0 : index
    %146 = vector.load %arg12[%145, %c0_42] : memref<64x512xf32, #tpu.memory_space<vmem>>, vector<8x512xf32>
    %147 = arith.truncf %143 : vector<8x128xf32> to vector<8x128xbf16>
    %cst_43 = arith.constant dense<0.000000e+00> : vector<8x512xf32>
    %148 = tpu.matmul %147, %17, %cst_43 {dimension_numbers = #tpu.dot_dimension_numbers<[1], [0], [0], [1], [0, 0, 1, 1], [], []>} : vector<8x128xbf16>, vector<128x512xbf16>, vector<8x512xf32> -> vector<8x512xf32>
    %149 = arith.addf %146, %148 : vector<8x512xf32>
    %150 = vector.extract_strided_slice %149 {offsets = [0, 0], sizes = [8, 128], strides = [1, 1]} : vector<8x512xf32> to vector<8x128xf32>
    %151 = arith.negf %150 : vector<8x128xf32>
    %152 = math.exp %151 : vector<8x128xf32>
    %cst_44 = arith.constant 1.000000e+00 : f32
    %153 = vector.broadcast %cst_44 : f32 to vector<8x128xf32>
    %154 = arith.addf %153, %152 : vector<8x128xf32>
    %155 = arith.divf %153, %154 : vector<8x128xf32>
    %156 = vector.extract_strided_slice %149 {offsets = [0, 128], sizes = [8, 128], strides = [1, 1]} : vector<8x512xf32> to vector<8x128xf32>
    %157 = arith.negf %156 : vector<8x128xf32>
    %158 = math.exp %157 : vector<8x128xf32>
    %cst_45 = arith.constant 1.000000e+00 : f32
    %159 = vector.broadcast %cst_45 : f32 to vector<8x128xf32>
    %160 = arith.addf %159, %158 : vector<8x128xf32>
    %161 = arith.divf %159, %160 : vector<8x128xf32>
    %162 = vector.extract_strided_slice %149 {offsets = [0, 256], sizes = [8, 128], strides = [1, 1]} : vector<8x512xf32> to vector<8x128xf32>
    %163 = math.tanh %162 : vector<8x128xf32>
    %164 = vector.extract_strided_slice %149 {offsets = [0, 384], sizes = [8, 128], strides = [1, 1]} : vector<8x512xf32> to vector<8x128xf32>
    %165 = arith.negf %164 : vector<8x128xf32>
    %166 = math.exp %165 : vector<8x128xf32>
    %cst_46 = arith.constant 1.000000e+00 : f32
    %167 = vector.broadcast %cst_46 : f32 to vector<8x128xf32>
    %168 = arith.addf %167, %166 : vector<8x128xf32>
    %169 = arith.divf %167, %168 : vector<8x128xf32>
    %170 = arith.mulf %161, %141 : vector<8x128xf32>
    %171 = arith.mulf %155, %163 : vector<8x128xf32>
    %172 = arith.addf %170, %171 : vector<8x128xf32>
    %173 = math.tanh %172 : vector<8x128xf32>
    %174 = arith.mulf %169, %173 : vector<8x128xf32>
    %c5_i32 = arith.constant 5 : i32
    %c8_i32_47 = arith.constant 8 : i32
    %175 = arith.muli %c5_i32, %c8_i32_47 : i32
    %176 = arith.index_cast %175 : i32 to index
    %c0_48 = arith.constant 0 : index
    %177 = vector.load %arg12[%176, %c0_48] : memref<64x512xf32, #tpu.memory_space<vmem>>, vector<8x512xf32>
    %178 = arith.truncf %174 : vector<8x128xf32> to vector<8x128xbf16>
    %cst_49 = arith.constant dense<0.000000e+00> : vector<8x512xf32>
    %179 = tpu.matmul %178, %17, %cst_49 {dimension_numbers = #tpu.dot_dimension_numbers<[1], [0], [0], [1], [0, 0, 1, 1], [], []>} : vector<8x128xbf16>, vector<128x512xbf16>, vector<8x512xf32> -> vector<8x512xf32>
    %180 = arith.addf %177, %179 : vector<8x512xf32>
    %181 = vector.extract_strided_slice %180 {offsets = [0, 0], sizes = [8, 128], strides = [1, 1]} : vector<8x512xf32> to vector<8x128xf32>
    %182 = arith.negf %181 : vector<8x128xf32>
    %183 = math.exp %182 : vector<8x128xf32>
    %cst_50 = arith.constant 1.000000e+00 : f32
    %184 = vector.broadcast %cst_50 : f32 to vector<8x128xf32>
    %185 = arith.addf %184, %183 : vector<8x128xf32>
    %186 = arith.divf %184, %185 : vector<8x128xf32>
    %187 = vector.extract_strided_slice %180 {offsets = [0, 128], sizes = [8, 128], strides = [1, 1]} : vector<8x512xf32> to vector<8x128xf32>
    %188 = arith.negf %187 : vector<8x128xf32>
    %189 = math.exp %188 : vector<8x128xf32>
    %cst_51 = arith.constant 1.000000e+00 : f32
    %190 = vector.broadcast %cst_51 : f32 to vector<8x128xf32>
    %191 = arith.addf %190, %189 : vector<8x128xf32>
    %192 = arith.divf %190, %191 : vector<8x128xf32>
    %193 = vector.extract_strided_slice %180 {offsets = [0, 256], sizes = [8, 128], strides = [1, 1]} : vector<8x512xf32> to vector<8x128xf32>
    %194 = math.tanh %193 : vector<8x128xf32>
    %195 = vector.extract_strided_slice %180 {offsets = [0, 384], sizes = [8, 128], strides = [1, 1]} : vector<8x512xf32> to vector<8x128xf32>
    %196 = arith.negf %195 : vector<8x128xf32>
    %197 = math.exp %196 : vector<8x128xf32>
    %cst_52 = arith.constant 1.000000e+00 : f32
    %198 = vector.broadcast %cst_52 : f32 to vector<8x128xf32>
    %199 = arith.addf %198, %197 : vector<8x128xf32>
    %200 = arith.divf %198, %199 : vector<8x128xf32>
    %201 = arith.mulf %192, %172 : vector<8x128xf32>
    %202 = arith.mulf %186, %194 : vector<8x128xf32>
    %203 = arith.addf %201, %202 : vector<8x128xf32>
    %204 = math.tanh %203 : vector<8x128xf32>
    %205 = arith.mulf %200, %204 : vector<8x128xf32>
    %c6_i32 = arith.constant 6 : i32
    %c8_i32_53 = arith.constant 8 : i32
    %206 = arith.muli %c6_i32, %c8_i32_53 : i32
    %207 = arith.index_cast %206 : i32 to index
    %c0_54 = arith.constant 0 : index
    %208 = vector.load %arg12[%207, %c0_54] : memref<64x512xf32, #tpu.memory_space<vmem>>, vector<8x512xf32>
    %209 = arith.truncf %205 : vector<8x128xf32> to vector<8x128xbf16>
    %cst_55 = arith.constant dense<0.000000e+00> : vector<8x512xf32>
    %210 = tpu.matmul %209, %17, %cst_55 {dimension_numbers = #tpu.dot_dimension_numbers<[1], [0], [0], [1], [0, 0, 1, 1], [], []>} : vector<8x128xbf16>, vector<128x512xbf16>, vector<8x512xf32> -> vector<8x512xf32>
    %211 = arith.addf %208, %210 : vector<8x512xf32>
    %212 = vector.extract_strided_slice %211 {offsets = [0, 0], sizes = [8, 128], strides = [1, 1]} : vector<8x512xf32> to vector<8x128xf32>
    %213 = arith.negf %212 : vector<8x128xf32>
    %214 = math.exp %213 : vector<8x128xf32>
    %cst_56 = arith.constant 1.000000e+00 : f32
    %215 = vector.broadcast %cst_56 : f32 to vector<8x128xf32>
    %216 = arith.addf %215, %214 : vector<8x128xf32>
    %217 = arith.divf %215, %216 : vector<8x128xf32>
    %218 = vector.extract_strided_slice %211 {offsets = [0, 128], sizes = [8, 128], strides = [1, 1]} : vector<8x512xf32> to vector<8x128xf32>
    %219 = arith.negf %218 : vector<8x128xf32>
    %220 = math.exp %219 : vector<8x128xf32>
    %cst_57 = arith.constant 1.000000e+00 : f32
    %221 = vector.broadcast %cst_57 : f32 to vector<8x128xf32>
    %222 = arith.addf %221, %220 : vector<8x128xf32>
    %223 = arith.divf %221, %222 : vector<8x128xf32>
    %224 = vector.extract_strided_slice %211 {offsets = [0, 256], sizes = [8, 128], strides = [1, 1]} : vector<8x512xf32> to vector<8x128xf32>
    %225 = math.tanh %224 : vector<8x128xf32>
    %226 = vector.extract_strided_slice %211 {offsets = [0, 384], sizes = [8, 128], strides = [1, 1]} : vector<8x512xf32> to vector<8x128xf32>
    %227 = arith.negf %226 : vector<8x128xf32>
    %228 = math.exp %227 : vector<8x128xf32>
    %cst_58 = arith.constant 1.000000e+00 : f32
    %229 = vector.broadcast %cst_58 : f32 to vector<8x128xf32>
    %230 = arith.addf %229, %228 : vector<8x128xf32>
    %231 = arith.divf %229, %230 : vector<8x128xf32>
    %232 = arith.mulf %223, %203 : vector<8x128xf32>
    %233 = arith.mulf %217, %225 : vector<8x128xf32>
    %234 = arith.addf %232, %233 : vector<8x128xf32>
    %235 = math.tanh %234 : vector<8x128xf32>
    %236 = arith.mulf %231, %235 : vector<8x128xf32>
    %c7_i32 = arith.constant 7 : i32
    %c8_i32_59 = arith.constant 8 : i32
    %237 = arith.muli %c7_i32, %c8_i32_59 : i32
    %238 = arith.index_cast %237 : i32 to index
    %c0_60 = arith.constant 0 : index
    %239 = vector.load %arg12[%238, %c0_60] : memref<64x512xf32, #tpu.memory_space<vmem>>, vector<8x512xf32>
    %240 = arith.truncf %236 : vector<8x128xf32> to vector<8x128xbf16>
    %cst_61 = arith.constant dense<0.000000e+00> : vector<8x512xf32>
    %241 = tpu.matmul %240, %17, %cst_61 {dimension_numbers = #tpu.dot_dimension_numbers<[1], [0], [0], [1], [0, 0, 1, 1], [], []>} : vector<8x128xbf16>, vector<128x512xbf16>, vector<8x512xf32> -> vector<8x512xf32>
    %242 = arith.addf %239, %241 : vector<8x512xf32>
    %243 = vector.extract_strided_slice %242 {offsets = [0, 0], sizes = [8, 128], strides = [1, 1]} : vector<8x512xf32> to vector<8x128xf32>
    %244 = arith.negf %243 : vector<8x128xf32>
    %245 = math.exp %244 : vector<8x128xf32>
    %cst_62 = arith.constant 1.000000e+00 : f32
    %246 = vector.broadcast %cst_62 : f32 to vector<8x128xf32>
    %247 = arith.addf %246, %245 : vector<8x128xf32>
    %248 = arith.divf %246, %247 : vector<8x128xf32>
    %249 = vector.extract_strided_slice %242 {offsets = [0, 128], sizes = [8, 128], strides = [1, 1]} : vector<8x512xf32> to vector<8x128xf32>
    %250 = arith.negf %249 : vector<8x128xf32>
    %251 = math.exp %250 : vector<8x128xf32>
    %cst_63 = arith.constant 1.000000e+00 : f32
    %252 = vector.broadcast %cst_63 : f32 to vector<8x128xf32>
    %253 = arith.addf %252, %251 : vector<8x128xf32>
    %254 = arith.divf %252, %253 : vector<8x128xf32>
    %255 = vector.extract_strided_slice %242 {offsets = [0, 256], sizes = [8, 128], strides = [1, 1]} : vector<8x512xf32> to vector<8x128xf32>
    %256 = math.tanh %255 : vector<8x128xf32>
    %257 = vector.extract_strided_slice %242 {offsets = [0, 384], sizes = [8, 128], strides = [1, 1]} : vector<8x512xf32> to vector<8x128xf32>
    %258 = arith.negf %257 : vector<8x128xf32>
    %259 = math.exp %258 : vector<8x128xf32>
    %cst_64 = arith.constant 1.000000e+00 : f32
    %260 = vector.broadcast %cst_64 : f32 to vector<8x128xf32>
    %261 = arith.addf %260, %259 : vector<8x128xf32>
    %262 = arith.divf %260, %261 : vector<8x128xf32>
    %263 = arith.mulf %254, %234 : vector<8x128xf32>
    %264 = arith.mulf %248, %256 : vector<8x128xf32>
    %265 = arith.addf %263, %264 : vector<8x128xf32>
    %266 = math.tanh %265 : vector<8x128xf32>
    %267 = arith.mulf %262, %266 : vector<8x128xf32>
    %c8_i32_65 = arith.constant 8 : i32
    %c0_66 = arith.constant 0 : index
    %c0_67 = arith.constant 0 : index
    %268 = vector.load %arg10[%c0_66, %c0_67] : memref<8x128xf32, #tpu.memory_space<vmem>>, vector<8x128xf32>
    tpu.vector_store %arg10[%c0_66, %c0_67], %267 {strides = array<i32>} : memref<8x128xf32, #tpu.memory_space<vmem>>, vector<8x128xf32>,
    %c0_68 = arith.constant 0 : index
    %c0_69 = arith.constant 0 : index
    %269 = vector.load %arg11[%c0_68, %c0_69] : memref<8x128xf32, #tpu.memory_space<vmem>>, vector<8x128xf32>
    tpu.vector_store %arg11[%c0_68, %c0_69], %265 {strides = array<i32>} : memref<8x128xf32, #tpu.memory_space<vmem>>, vector<8x128xf32>,
    %270 = arith.truncf %267 : vector<8x128xf32> to vector<8x128xbf16>
    %c0_70 = arith.constant 0 : index
    %c0_71 = arith.constant 0 : index
    %271 = vector.load %arg7[%c0_70, %c0_71] : memref<128x128xbf16, #tpu.memory_space<vmem>>, vector<128x128xbf16>
    %cst_72 = arith.constant dense<0.000000e+00> : vector<8x128xf32>
    %272 = tpu.matmul %270, %271, %cst_72 {dimension_numbers = #tpu.dot_dimension_numbers<[1], [0], [0], [1], [0, 0, 1, 1], [], []>} : vector<8x128xbf16>, vector<128x128xbf16>, vector<8x128xf32> -> vector<8x128xf32>
    %c0_73 = arith.constant 0 : index
    %c0_74 = arith.constant 0 : index
    %273 = vector.load %arg8[%c0_73, %c0_74] : memref<1x128xf32, #tpu.memory_space<vmem>>, vector<1x128xf32>
    %274 = vector.broadcast %273 : vector<1x128xf32> to vector<8x128xf32>
    %275 = arith.addf %272, %274 : vector<8x128xf32>
    %c0_75 = arith.constant 0 : index
    %c0_76 = arith.constant 0 : index
    %276 = vector.load %arg9[%c0_75, %c0_76] : memref<8x128xf32, #tpu.memory_space<vmem>>, vector<8x128xf32>
    tpu.vector_store %arg9[%c0_75, %c0_76], %275 {strides = array<i32>} : memref<8x128xf32, #tpu.memory_space<vmem>>, vector<8x128xf32>,
    return
  }
}

</mosaic_0001>

<llo_original>
// kernel: forward.1
$region0: #{forward.1}
  #allocation0 [shape = 'u32[]', space=smem, size = 0x4, offset = 0x4, fixed_abs, tag = 'smem constant byte address 0x4 - core index']
  #allocation1 [shape = 'u32[72,128]{1,0:T(1,128)}', space=vmem, size = 0x9000, scoped, tag = 'internal scratch']
  #allocation2 [shape = 'f32[64,512]{1,0:T(8,128)}', space=vmem, size = 0x20000, scoped, tag = 'scratch operand']
  %s0 = inlined_call_operand.vmem [shape: s32[64,1], index: 0, kind: input, shape index: {}]
  %s1 = inlined_call_operand.vmem [shape: bf16[64,32], index: 1, kind: input, shape index: {}]
  %s2 = inlined_call_operand.vmem [shape: f32[8,128], index: 2, kind: input, shape index: {}]
  %s3 = inlined_call_operand.vmem [shape: f32[8,128], index: 3, kind: input, shape index: {}]
  %s4 = inlined_call_operand.hbm [shape: bf16[32,512], index: 4, kind: input, shape index: {}]
  %s5 = inlined_call_operand.hbm [shape: bf16[128,512], index: 5, kind: input, shape index: {}]
  %s6 = inlined_call_operand.vmem [shape: f32[1,512], index: 6, kind: input, shape index: {}]
  %s7 = inlined_call_operand.vmem [shape: bf16[128,128], index: 7, kind: input, shape index: {}]
  %s8 = inlined_call_operand.vmem [shape: f32[1,128], index: 8, kind: input, shape index: {}]
  %s9 = inlined_call_operand.vmem [shape: f32[8,128], index: 9, kind: output, shape index: {0}]
  %s10 = inlined_call_operand.vmem [shape: f32[8,128], index: 10, kind: output, shape index: {1}]
  %s11 = inlined_call_operand.vmem [shape: f32[8,128], index: 11, kind: output, shape index: {2}]
  %12 = xla_tuple %s9, %s10, %s11
  %s13 = sld [smem:[#allocation0]]
  $region70: #{forward.1} parent=0
    _
  %s15 = ssub.s32 1, %s13
  %s16 = scalar_select 0, %s15, %s13
  $region1: #{forward.1} parent=0
    #allocation3 [shape = 'u8[32768]{0}', space=vmem, size = 0x8000, scoped, tag = 'input window, operand 4, single buffered']
    #allocation4 [shape = 's32[1]{0}', space=sflag, size = 0x4, scoped, tag = 'scoped memory for forward.1']
    #allocation5 [shape = 'u8[131072]{0}', space=vmem, size = 0x20000, scoped, tag = 'input window, operand 5, single buffered']
    #allocation6 [shape = 's32[1]{0}', space=sflag, size = 0x4, scoped, tag = 'scoped memory for forward.1']
    %17 = vsyncpa [#allocation4], 0
    %18 = vsyncpa [#allocation6], 0
    // Predicated region
    $region2: #{forward.1} parent=1 // pred_check
      _
    $region3: #{forward.1} parent=1 // pred_check_branch
      %20 = sbr.rel (0) target = $region5
    $region4: #{forward.1} parent=1 // pred_region
      _
    $region5: #{forward.1} parent=1 // pred_fallthru
      _
    // Predicated region
    $region6: #{forward.1} parent=1 // pred_check
      _
    $region7: #{forward.1} parent=1 // pred_check_branch
      %22 = sbr.rel (0) target = $region9
    $region8: #{forward.1} parent=1 // pred_region
      _
    $region9: #{forward.1} parent=1 // pred_fallthru
      _
    // Predicated region
    $region10: #{forward.1} parent=1 // pred_check
      _
    $region11: #{forward.1} parent=1 // pred_check_branch
      %24 = sbr.rel (0) target = $region13
    $region12: #{forward.1} parent=1 // pred_region
      _
    $region13: #{forward.1} parent=1 // pred_fallthru
      _
    // Predicated region
    $region14: #{forward.1} parent=1 // pred_check
      _
    $region15: #{forward.1} parent=1 // pred_check_branch
      %26 = sbr.rel (0) target = $region17
    $region16: #{forward.1} parent=1 // pred_region
      _
    $region17: #{forward.1} parent=1 // pred_fallthru
      _
    // Predicated region
    $region18: #{forward.1} parent=1 // pred_check
      _
    $region19: #{forward.1} parent=1 // pred_check_branch
      %28 = sbr.rel (0) target = $region21
    $region20: #{forward.1} parent=1 // pred_region
      %30 = vsyncadd [#allocation4], 0
      %s31 = sshll.u32 %s4, 4
      %s32 = int_to_ptr.hbm [resolvable:$true] %s31
      %s33 = sshll.u32 [#allocation3], 4
      %s34 = int_to_ptr.vmem [resolvable:$true] %s33
      %39 = dma.hbm_to_vmem [thread:$0]  %s32, 1024, %s34, [#allocation4], 256, 256, 16
    $region21: #{forward.1} parent=1 // pred_fallthru
      _
    // Predicated region
    $region22: #{forward.1} parent=1 // pred_check
      _
    $region23: #{forward.1} parent=1 // pred_check_branch
      %41 = sbr.rel (0) target = $region25
    $region24: #{forward.1} parent=1 // pred_region
      %43 = vsyncadd [#allocation6], 0
      %s44 = sshll.u32 %s5, 4
      %s45 = int_to_ptr.hbm [resolvable:$true] %s44
      %s46 = sshll.u32 [#allocation5], 4
      %s47 = int_to_ptr.vmem [resolvable:$true] %s46
      %52 = dma.hbm_to_vmem [thread:$0]  %s45, 4096, %s47, [#allocation6], 256, 256, 16
    $region25: #{forward.1} parent=1 // pred_fallthru
      _
    // Predicated region
    $region26: #{forward.1} parent=1 // pred_check
      _
    $region27: #{forward.1} parent=1 // pred_check_branch
      %54 = sbr.rel (0) target = $region29
    $region28: #{forward.1} parent=1 // pred_region
      _
    $region29: #{forward.1} parent=1 // pred_fallthru
      _
    // Predicated region
    $region30: #{forward.1} parent=1 // pred_check
      _
    $region31: #{forward.1} parent=1 // pred_check_branch
      %56 = sbr.rel (0) target = $region33
    $region32: #{forward.1} parent=1 // pred_region
      _
    $region33: #{forward.1} parent=1 // pred_fallthru
      _
    // Predicated region
    $region34: #{forward.1} parent=1 // pred_check
      _
    $region35: #{forward.1} parent=1 // pred_check_branch
      %58 = sbr.rel (0) target = $region37
    $region36: #{forward.1} parent=1 // pred_region
      _
    $region37: #{forward.1} parent=1 // pred_fallthru
      _
    // Predicated region
    $region38: #{forward.1} parent=1 // pred_check
      _
    $region39: #{forward.1} parent=1 // pred_check_branch
      %60 = sbr.rel (0) target = $region41
    $region40: #{forward.1} parent=1 // pred_region
      %62 = dma.done [#allocation4], 1024
    $region41: #{forward.1} parent=1 // pred_fallthru
      _
    // Predicated region
    $region42: #{forward.1} parent=1 // pred_check
      _
    $region43: #{forward.1} parent=1 // pred_check_branch
      %64 = sbr.rel (0) target = $region45
    $region44: #{forward.1} parent=1 // pred_region
      %66 = dma.done [#allocation6], 4096
    $region45: #{forward.1} parent=1 // pred_fallthru
      _
    %v68 = vld [vmem:[%s0] sm:$0xff]
    %v69 = vld [vmem:[%s0 + $0x8] sm:$0xff]
    %v70 = vld [vmem:[%s0 + $0x10] sm:$0xff]
    %v71 = vld [vmem:[%s0 + $0x18] sm:$0xff]
    %v72 = vld [vmem:[%s0 + $0x20] sm:$0xff]
    %v73 = vld [vmem:[%s0 + $0x28] sm:$0xff]
    %v74 = vld [vmem:[%s0 + $0x30] sm:$0xff]
    %v75 = vld [vmem:[%s0 + $0x38] sm:$0xff]
    %v76 = vlaneseq
    %v77 = vand.u32 %v76, 127
    %78 = vset.pattern.permute.xlu0 0
    %79 = vperm.xlu0 %78, %v68
    %v80 = vpop.permute.xlu0 %79
    %81 = vset.pattern.permute.xlu0 0
    %82 = vperm.xlu0 %81, %v69
    %v83 = vpop.permute.xlu0 %82
    %84 = vset.pattern.permute.xlu0 0
    %85 = vperm.xlu0 %84, %v70
    %v86 = vpop.permute.xlu0 %85
    %87 = vset.pattern.permute.xlu0 0
    %88 = vperm.xlu0 %87, %v71
    %v89 = vpop.permute.xlu0 %88
    %90 = vset.pattern.permute.xlu0 0
    %91 = vperm.xlu0 %90, %v72
    %v92 = vpop.permute.xlu0 %91
    %93 = vset.pattern.permute.xlu0 0
    %94 = vperm.xlu0 %93, %v73
    %v95 = vpop.permute.xlu0 %94
    %96 = vset.pattern.permute.xlu0 0
    %97 = vperm.xlu0 %96, %v74
    %v98 = vpop.permute.xlu0 %97
    %99 = vset.pattern.permute.xlu0 0
    %100 = vperm.xlu0 %99, %v75
    %v101 = vpop.permute.xlu0 %100
    %vm102 = vcmp.eq.s32.totalorder %v77, %v80
    %vm103 = vcmp.eq.s32.totalorder %v77, %v83
    %vm104 = vcmp.eq.s32.totalorder %v77, %v86
    %vm105 = vcmp.eq.s32.totalorder %v77, %v89
    %vm106 = vcmp.eq.s32.totalorder %v77, %v92
    %vm107 = vcmp.eq.s32.totalorder %v77, %v95
    %vm108 = vcmp.eq.s32.totalorder %v77, %v98
    %vm109 = vcmp.eq.s32.totalorder %v77, %v101
    %v110 = vsel %vm102, 1.0, 0.0
    %v111 = vsel %vm103, 1.0, 0.0
    %v112 = vsel %vm104, 1.0, 0.0
    %v113 = vsel %vm105, 1.0, 0.0
    %v114 = vsel %vm106, 1.0, 0.0
    %v115 = vsel %vm107, 1.0, 0.0
    %v116 = vsel %vm108, 1.0, 0.0
    %v117 = vsel %vm109, 1.0, 0.0
    %v118 = vpack.c.bf16 %v111, %v110
    %v119 = vpack.c.bf16 %v113, %v112
    %v120 = vpack.c.bf16 %v115, %v114
    %v121 = vpack.c.bf16 %v117, %v116
    %v122 = vld [vmem:[%s1] sm:$0xf]
    %v123 = vld [vmem:[%s1 + $0x4] sm:$0xf]
    %v124 = vld [vmem:[%s1 + $0x8] sm:$0xf]
    %v125 = vld [vmem:[%s1 + $0xc] sm:$0xf]
    %v126 = vld [vmem:[%s1 + $0x10] sm:$0xf]
    %v127 = vld [vmem:[%s1 + $0x14] sm:$0xf]
    %v128 = vld [vmem:[%s1 + $0x18] sm:$0xf]
    %v129 = vld [vmem:[%s1 + $0x1c] sm:$0xf]
    %v138 = vunpack.c.l.b16 %v122
    %v139 = vunpack.c.l.b16 %v123
    %v140 = vunpack.c.l.b16 %v124
    %v141 = vunpack.c.l.b16 %v125
    %v142 = vunpack.c.l.b16 %v126
    %v143 = vunpack.c.l.b16 %v127
    %v144 = vunpack.c.l.b16 %v128
    %v145 = vunpack.c.l.b16 %v129
    %v146 = vpack.c.b16 %v139, %v138
    %v147 = vpack.c.b16 %v141, %v140
    %v148 = vpack.c.b16 %v143, %v142
    %v149 = vpack.c.b16 %v145, %v144
    %vm154 = vcmask 523264
    %v156 = vsel %vm154, %v118, 0
    %v159 = vsel %vm154, %v119, 0
    %v162 = vsel %vm154, %v120, 0
    %v165 = vsel %vm154, %v121, 0
    %167 = vmatpush.bf16.msra.mxu0 0
    %168 = vmatpush.bf16.msra.mxu0 0
    %169 = vmatpush.bf16.msra.mxu0 0
    %170 = vmatpush.bf16.msra.mxu0 0
    %171 = vmatpush.bf16.msra.mxu0 %v149
    %172 = vmatpush.bf16.msra.mxu0 %v148
    %173 = vmatpush.bf16.msra.mxu0 %v147
    %174 = vmatpush.bf16.msra.mxu0 %v146
    %175 = vmatmul.bf16.gmra.mxu0 %v156
    %v176 = vpop.f32.mrf.mxu0
    %v177 = vadd.f32 0.0, %v176
    %v178 = vpop.f32.mrf.mxu0
    %v179 = vadd.f32 0.0, %v178
    %180 = vmatmul.bf16.gmra.mxu0 %v159
    %v181 = vpop.f32.mrf.mxu0
    %v182 = vadd.f32 0.0, %v181
    %v183 = vpop.f32.mrf.mxu0
    %v184 = vadd.f32 0.0, %v183
    %185 = vmatmul.bf16.gmra.mxu0 %v162
    %v186 = vpop.f32.mrf.mxu0
    %v187 = vadd.f32 0.0, %v186
    %v188 = vpop.f32.mrf.mxu0
    %v189 = vadd.f32 0.0, %v188
    %190 = vmatmul.bf16.gmra.mxu0 %v165
    %v191 = vpop.f32.mrf.mxu0
    %v192 = vadd.f32 0.0, %v191
    %v193 = vpop.f32.mrf.mxu0
    %v194 = vadd.f32 0.0, %v193
    %195 = vdwg.mxu0
    %v196 = vpack.c.bf16 %v179, %v177
    %v197 = vpack.c.bf16 %v184, %v182
    %v198 = vpack.c.bf16 %v189, %v187
    %v199 = vpack.c.bf16 %v194, %v192
    %v200 = vld [vmem:[#allocation3] sm:$0xff]
    %v201 = vld [vmem:[#allocation3 + $0x8] sm:$0xff]
    %v202 = vld [vmem:[#allocation3 + $0x10] sm:$0xff]
    %v203 = vld [vmem:[#allocation3 + $0x18] sm:$0xff]
    %v204 = vld [vmem:[#allocation3 + $0x20] sm:$0xff]
    %v205 = vld [vmem:[#allocation3 + $0x28] sm:$0xff]
    %v206 = vld [vmem:[#allocation3 + $0x30] sm:$0xff]
    %v207 = vld [vmem:[#allocation3 + $0x38] sm:$0xff]
    %v208 = vld [vmem:[%s6] sm:$0xf]
    %v210 = vperm.slane %v208, 0
    %v211 = vperm.slane %v208, 1
    %v212 = vperm.slane %v208, 2
    %v213 = vperm.slane %v208, 3
    %v226 = vunpack.c.l.b16 %v200
    %v227 = vunpack.c.h.b16 %v200
    %v228 = vunpack.c.l.b16 %v201
    %v229 = vunpack.c.h.b16 %v201
    %v230 = vunpack.c.l.b16 %v202
    %v231 = vunpack.c.h.b16 %v202
    %v232 = vunpack.c.l.b16 %v203
    %v233 = vunpack.c.h.b16 %v203
    %v234 = vunpack.c.l.b16 %v204
    %v235 = vunpack.c.h.b16 %v204
    %v236 = vunpack.c.l.b16 %v205
    %v237 = vunpack.c.h.b16 %v205
    %v238 = vunpack.c.l.b16 %v206
    %v239 = vunpack.c.h.b16 %v206
    %v240 = vunpack.c.l.b16 %v207
    %v241 = vunpack.c.h.b16 %v207
    %v242 = vpack.c.b16 %v230, %v226
    %v243 = vpack.c.b16 %v231, %v227
    %v244 = vpack.c.b16 %v232, %v228
    %v245 = vpack.c.b16 %v233, %v229
    %v246 = vpack.c.b16 %v238, %v234
    %v247 = vpack.c.b16 %v239, %v235
    %v248 = vpack.c.b16 %v240, %v236
    %v249 = vpack.c.b16 %v241, %v237
    %vm258 = vcmask 261120
    %v260 = vsel %vm258, %v196, 0
    %v263 = vsel %vm258, %v197, 0
    %v266 = vsel %vm258, %v198, 0
    %v269 = vsel %vm258, %v199, 0
    %271 = vmatpush.bf16.msra.mxu0 0
    %272 = vmatpush.bf16.msra.mxu0 0
    %273 = vmatpush.bf16.msra.mxu0 0
    %274 = vmatpush.bf16.msra.mxu0 0
    %275 = vmatpush.bf16.msra.mxu0 0
    %276 = vmatpush.bf16.msra.mxu0 0
    %277 = vmatpush.bf16.msra.mxu0 %v246
    %278 = vmatpush.bf16.msra.mxu0 %v242
    %279 = vmatmul.bf16.gmra.mxu0 %v260
    %v280 = vpop.f32.mrf.mxu0
    %v281 = vadd.f32 %v210, %v280
    %v282 = vpop.f32.mrf.mxu0
    %v283 = vadd.f32 %v210, %v282
    %284 = vmatmul.bf16.gmra.mxu0 %v263
    %v285 = vpop.f32.mrf.mxu0
    %v286 = vadd.f32 %v210, %v285
    %v287 = vpop.f32.mrf.mxu0
    %v288 = vadd.f32 %v210, %v287
    %289 = vmatmul.bf16.gmra.mxu0 %v266
    %v290 = vpop.f32.mrf.mxu0
    %v291 = vadd.f32 %v210, %v290
    %v292 = vpop.f32.mrf.mxu0
    %v293 = vadd.f32 %v210, %v292
    %294 = vmatmul.bf16.gmra.mxu0 %v269
    %v295 = vpop.f32.mrf.mxu0
    %v296 = vadd.f32 %v210, %v295
    %v297 = vpop.f32.mrf.mxu0
    %v298 = vadd.f32 %v210, %v297
    %299 = vdwg.mxu0
    %300 = vmatpush.bf16.msra.mxu0 0
    %301 = vmatpush.bf16.msra.mxu0 0
    %302 = vmatpush.bf16.msra.mxu0 0
    %303 = vmatpush.bf16.msra.mxu0 0
    %304 = vmatpush.bf16.msra.mxu0 0
    %305 = vmatpush.bf16.msra.mxu0 0
    %306 = vmatpush.bf16.msra.mxu0 %v247
    %307 = vmatpush.bf16.msra.mxu0 %v243
    %308 = vmatmul.bf16.gmra.mxu0 %v260
    %v309 = vpop.f32.mrf.mxu0
    %v310 = vadd.f32 %v211, %v309
    %v311 = vpop.f32.mrf.mxu0
    %v312 = vadd.f32 %v211, %v311
    %313 = vmatmul.bf16.gmra.mxu0 %v263
    %v314 = vpop.f32.mrf.mxu0
    %v315 = vadd.f32 %v211, %v314
    %v316 = vpop.f32.mrf.mxu0
    %v317 = vadd.f32 %v211, %v316
    %318 = vmatmul.bf16.gmra.mxu0 %v266
    %v319 = vpop.f32.mrf.mxu0
    %v320 = vadd.f32 %v211, %v319
    %v321 = vpop.f32.mrf.mxu0
    %v322 = vadd.f32 %v211, %v321
    %323 = vmatmul.bf16.gmra.mxu0 %v269
    %v324 = vpop.f32.mrf.mxu0
    %v325 = vadd.f32 %v211, %v324
    %v326 = vpop.f32.mrf.mxu0
    %v327 = vadd.f32 %v211, %v326
    %328 = vdwg.mxu0
    %329 = vmatpush.bf16.msra.mxu0 0
    %330 = vmatpush.bf16.msra.mxu0 0
    %331 = vmatpush.bf16.msra.mxu0 0
    %332 = vmatpush.bf16.msra.mxu0 0
    %333 = vmatpush.bf16.msra.mxu0 0
    %334 = vmatpush.bf16.msra.mxu0 0
    %335 = vmatpush.bf16.msra.mxu0 %v248
    %336 = vmatpush.bf16.msra.mxu0 %v244
    %337 = vmatmul.bf16.gmra.mxu0 %v260
    %v338 = vpop.f32.mrf.mxu0
    %v339 = vadd.f32 %v212, %v338
    %v340 = vpop.f32.mrf.mxu0
    %v341 = vadd.f32 %v212, %v340
    %342 = vmatmul.bf16.gmra.mxu0 %v263
    %v343 = vpop.f32.mrf.mxu0
    %v344 = vadd.f32 %v212, %v343
    %v345 = vpop.f32.mrf.mxu0
    %v346 = vadd.f32 %v212, %v345
    %347 = vmatmul.bf16.gmra.mxu0 %v266
    %v348 = vpop.f32.mrf.mxu0
    %v349 = vadd.f32 %v212, %v348
    %v350 = vpop.f32.mrf.mxu0
    %v351 = vadd.f32 %v212, %v350
    %352 = vmatmul.bf16.gmra.mxu0 %v269
    %v353 = vpop.f32.mrf.mxu0
    %v354 = vadd.f32 %v212, %v353
    %v355 = vpop.f32.mrf.mxu0
    %v356 = vadd.f32 %v212, %v355
    %357 = vdwg.mxu0
    %358 = vmatpush.bf16.msra.mxu0 0
    %359 = vmatpush.bf16.msra.mxu0 0
    %360 = vmatpush.bf16.msra.mxu0 0
    %361 = vmatpush.bf16.msra.mxu0 0
    %362 = vmatpush.bf16.msra.mxu0 0
    %363 = vmatpush.bf16.msra.mxu0 0
    %364 = vmatpush.bf16.msra.mxu0 %v249
    %365 = vmatpush.bf16.msra.mxu0 %v245
    %366 = vmatmul.bf16.gmra.mxu0 %v260
    %v367 = vpop.f32.mrf.mxu0
    %v368 = vadd.f32 %v213, %v367
    %v369 = vpop.f32.mrf.mxu0
    %v370 = vadd.f32 %v213, %v369
    %371 = vmatmul.bf16.gmra.mxu0 %v263
    %v372 = vpop.f32.mrf.mxu0
    %v373 = vadd.f32 %v213, %v372
    %v374 = vpop.f32.mrf.mxu0
    %v375 = vadd.f32 %v213, %v374
    %376 = vmatmul.bf16.gmra.mxu0 %v266
    %v377 = vpop.f32.mrf.mxu0
    %v378 = vadd.f32 %v213, %v377
    %v379 = vpop.f32.mrf.mxu0
    %v380 = vadd.f32 %v213, %v379
    %381 = vmatmul.bf16.gmra.mxu0 %v269
    %v382 = vpop.f32.mrf.mxu0
    %v383 = vadd.f32 %v213, %v382
    %v384 = vpop.f32.mrf.mxu0
    %v385 = vadd.f32 %v213, %v384
    %386 = vdwg.mxu0
    %387 = vst [vmem:[#allocation2] sm:$0xff] %v281
    %388 = vst [vmem:[#allocation2 + $0x8] sm:$0xff] %v310
    %389 = vst [vmem:[#allocation2 + $0x10] sm:$0xff] %v339
    %390 = vst [vmem:[#allocation2 + $0x18] sm:$0xff] %v368
    %391 = vst [vmem:[#allocation2 + $0x20] sm:$0xff] %v283
    %392 = vst [vmem:[#allocation2 + $0x28] sm:$0xff] %v312
    %393 = vst [vmem:[#allocation2 + $0x30] sm:$0xff] %v341
    %394 = vst [vmem:[#allocation2 + $0x38] sm:$0xff] %v370
    %395 = vst [vmem:[#allocation2 + $0x40] sm:$0xff] %v286
    %396 = vst [vmem:[#allocation2 + $0x48] sm:$0xff] %v315
    %397 = vst [vmem:[#allocation2 + $0x50] sm:$0xff] %v344
    %398 = vst [vmem:[#allocation2 + $0x58] sm:$0xff] %v373
    %399 = vst [vmem:[#allocation2 + $0x60] sm:$0xff] %v288
    %400 = vst [vmem:[#allocation2 + $0x68] sm:$0xff] %v317
    %401 = vst [vmem:[#allocation2 + $0x70] sm:$0xff] %v346
    %402 = vst [vmem:[#allocation2 + $0x78] sm:$0xff] %v375
    %403 = vst [vmem:[#allocation2 + $0x80] sm:$0xff] %v291
    %404 = vst [vmem:[#allocation2 + $0x88] sm:$0xff] %v320
    %405 = vst [vmem:[#allocation2 + $0x90] sm:$0xff] %v349
    %406 = vst [vmem:[#allocation2 + $0x98] sm:$0xff] %v378
    %407 = vst [vmem:[#allocation2 + $0xa0] sm:$0xff] %v293
    %408 = vst [vmem:[#allocation2 + $0xa8] sm:$0xff] %v322
    %409 = vst [vmem:[#allocation2 + $0xb0] sm:$0xff] %v351
    %410 = vst [vmem:[#allocation2 + $0xb8] sm:$0xff] %v380
    %411 = vst [vmem:[#allocation2 + $0xc0] sm:$0xff] %v296
    %412 = vst [vmem:[#allocation2 + $0xc8] sm:$0xff] %v325
    %413 = vst [vmem:[#allocation2 + $0xd0] sm:$0xff] %v354
    %414 = vst [vmem:[#allocation2 + $0xd8] sm:$0xff] %v383
    %415 = vst [vmem:[#allocation2 + $0xe0] sm:$0xff] %v298
    %416 = vst [vmem:[#allocation2 + $0xe8] sm:$0xff] %v327
    %417 = vst [vmem:[#allocation2 + $0xf0] sm:$0xff] %v356
    %418 = vst [vmem:[#allocation2 + $0xf8] sm:$0xff] %v385
    %v419 = vld [vmem:[#allocation5] sm:$0xff]
    %v420 = vld [vmem:[#allocation5 + $0x8] sm:$0xff]
    %v421 = vld [vmem:[#allocation5 + $0x10] sm:$0xff]
    %v422 = vld [vmem:[#allocation5 + $0x18] sm:$0xff]
    %v423 = vld [vmem:[#allocation5 + $0x20] sm:$0xff]
    %v424 = vld [vmem:[#allocation5 + $0x28] sm:$0xff]
    %v425 = vld [vmem:[#allocation5 + $0x30] sm:$0xff]
    %v426 = vld [vmem:[#allocation5 + $0x38] sm:$0xff]
    %v427 = vld [vmem:[#allocation5 + $0x40] sm:$0xff]
    %v428 = vld [vmem:[#allocation5 + $0x48] sm:$0xff]
    %v429 = vld [vmem:[#allocation5 + $0x50] sm:$0xff]
    %v430 = vld [vmem:[#allocation5 + $0x58] sm:$0xff]
    %v431 = vld [vmem:[#allocation5 + $0x60] sm:$0xff]
    %v432 = vld [vmem:[#allocation5 + $0x68] sm:$0xff]
    %v433 = vld [vmem:[#allocation5 + $0x70] sm:$0xff]
    %v434 = vld [vmem:[#allocation5 + $0x78] sm:$0xff]
    %v435 = vld [vmem:[#allocation5 + $0x80] sm:$0xff]
    %v436 = vld [vmem:[#allocation5 + $0x88] sm:$0xff]
    %v437 = vld [vmem:[#allocation5 + $0x90] sm:$0xff]
    %v438 = vld [vmem:[#allocation5 + $0x98] sm:$0xff]
    %v439 = vld [vmem:[#allocation5 + $0xa0] sm:$0xff]
    %v440 = vld [vmem:[#allocation5 + $0xa8] sm:$0xff]
    %v441 = vld [vmem:[#allocation5 + $0xb0] sm:$0xff]
    %v442 = vld [vmem:[#allocation5 + $0xb8] sm:$0xff]
    %v443 = vld [vmem:[#allocation5 + $0xc0] sm:$0xff]
    %v444 = vld [vmem:[#allocation5 + $0xc8] sm:$0xff]
    %v445 = vld [vmem:[#allocation5 + $0xd0] sm:$0xff]
    %v446 = vld [vmem:[#allocation5 + $0xd8] sm:$0xff]
    %v447 = vld [vmem:[#allocation5 + $0xe0] sm:$0xff]
    %v448 = vld [vmem:[#allocation5 + $0xe8] sm:$0xff]
    %v449 = vld [vmem:[#allocation5 + $0xf0] sm:$0xff]
    %v450 = vld [vmem:[#allocation5 + $0xf8] sm:$0xff]
    %v451 = vld [vmem:[%s2] sm:$0xff]
    %v452 = vld [vmem:[%s3] sm:$0xff]
    %v453 = vld [vmem:[#allocation2] sm:$0xff]
    %v454 = vld [vmem:[#allocation2 + $0x8] sm:$0xff]
    %v455 = vld [vmem:[#allocation2 + $0x10] sm:$0xff]
    %v456 = vld [vmem:[#allocation2 + $0x18] sm:$0xff]
    %v457 = vpack.c.bf16 %v451, %v451
    %v490 = vunpack.c.l.b16 %v419
    %v491 = vunpack.c.h.b16 %v419
    %v492 = vunpack.c.l.b16 %v420
    %v493 = vunpack.c.h.b16 %v420
    %v494 = vunpack.c.l.b16 %v421
    %v495 = vunpack.c.h.b16 %v421
    %v496 = vunpack.c.l.b16 %v422
    %v497 = vunpack.c.h.b16 %v422
    %v498 = vunpack.c.l.b16 %v423
    %v499 = vunpack.c.h.b16 %v423
    %v500 = vunpack.c.l.b16 %v424
    %v501 = vunpack.c.h.b16 %v424
    %v502 = vunpack.c.l.b16 %v425
    %v503 = vunpack.c.h.b16 %v425
    %v504 = vunpack.c.l.b16 %v426
    %v505 = vunpack.c.h.b16 %v426
    %v506 = vunpack.c.l.b16 %v427
    %v507 = vunpack.c.h.b16 %v427
    %v508 = vunpack.c.l.b16 %v428
    %v509 = vunpack.c.h.b16 %v428
    %v510 = vunpack.c.l.b16 %v429
    %v511 = vunpack.c.h.b16 %v429
    %v512 = vunpack.c.l.b16 %v430
    %v513 = vunpack.c.h.b16 %v430
    %v514 = vunpack.c.l.b16 %v431
    %v515 = vunpack.c.h.b16 %v431
    %v516 = vunpack.c.l.b16 %v432
    %v517 = vunpack.c.h.b16 %v432
    %v518 = vunpack.c.l.b16 %v433
    %v519 = vunpack.c.h.b16 %v433
    %v520 = vunpack.c.l.b16 %v434
    %v521 = vunpack.c.h.b16 %v434
    %v522 = vunpack.c.l.b16 %v435
    %v523 = vunpack.c.h.b16 %v435
    %v524 = vunpack.c.l.b16 %v436
    %v525 = vunpack.c.h.b16 %v436
    %v526 = vunpack.c.l.b16 %v437
    %v527 = vunpack.c.h.b16 %v437
    %v528 = vunpack.c.l.b16 %v438
    %v529 = vunpack.c.h.b16 %v438
    %v530 = vunpack.c.l.b16 %v439
    %v531 = vunpack.c.h.b16 %v439
    %v532 = vunpack.c.l.b16 %v440
    %v533 = vunpack.c.h.b16 %v440
    %v534 = vunpack.c.l.b16 %v441
    %v535 = vunpack.c.h.b16 %v441
    %v536 = vunpack.c.l.b16 %v442
    %v537 = vunpack.c.h.b16 %v442
    %v538 = vunpack.c.l.b16 %v443
    %v539 = vunpack.c.h.b16 %v443
    %v540 = vunpack.c.l.b16 %v444
    %v541 = vunpack.c.h.b16 %v444
    %v542 = vunpack.c.l.b16 %v445
    %v543 = vunpack.c.h.b16 %v445
    %v544 = vunpack.c.l.b16 %v446
    %v545 = vunpack.c.h.b16 %v446
    %v546 = vunpack.c.l.b16 %v447
    %v547 = vunpack.c.h.b16 %v447
    %v548 = vunpack.c.l.b16 %v448
    %v549 = vunpack.c.h.b16 %v448
    %v550 = vunpack.c.l.b16 %v449
    %v551 = vunpack.c.h.b16 %v449
    %v552 = vunpack.c.l.b16 %v450
    %v553 = vunpack.c.h.b16 %v450
    %v554 = vpack.c.b16 %v494, %v490
    %v555 = vpack.c.b16 %v495, %v491
    %v556 = vpack.c.b16 %v496, %v492
    %v557 = vpack.c.b16 %v497, %v493
    %v558 = vpack.c.b16 %v502, %v498
    %v559 = vpack.c.b16 %v503, %v499
    %v560 = vpack.c.b16 %v504, %v500
    %v561 = vpack.c.b16 %v505, %v501
    %v562 = vpack.c.b16 %v510, %v506
    %v563 = vpack.c.b16 %v511, %v507
    %v564 = vpack.c.b16 %v512, %v508
    %v565 = vpack.c.b16 %v513, %v509
    %v566 = vpack.c.b16 %v518, %v514
    %v567 = vpack.c.b16 %v519, %v515
    %v568 = vpack.c.b16 %v520, %v516
    %v569 = vpack.c.b16 %v521, %v517
    %v570 = vpack.c.b16 %v526, %v522
    %v571 = vpack.c.b16 %v527, %v523
    %v572 = vpack.c.b16 %v528, %v524
    %v573 = vpack.c.b16 %v529, %v525
    %v574 = vpack.c.b16 %v534, %v530
    %v575 = vpack.c.b16 %v535, %v531
    %v576 = vpack.c.b16 %v536, %v532
    %v577 = vpack.c.b16 %v537, %v533
    %v578 = vpack.c.b16 %v542, %v538
    %v579 = vpack.c.b16 %v543, %v539
    %v580 = vpack.c.b16 %v544, %v540
    %v581 = vpack.c.b16 %v545, %v541
    %v582 = vpack.c.b16 %v550, %v546
    %v583 = vpack.c.b16 %v551, %v547
    %v584 = vpack.c.b16 %v552, %v548
    %v585 = vpack.c.b16 %v553, %v549
    %618 = vmatpush.bf16.msra.mxu0 %v582
    %619 = vmatpush.bf16.msra.mxu0 %v578
    %620 = vmatpush.bf16.msra.mxu0 %v574
    %621 = vmatpush.bf16.msra.mxu0 %v570
    %622 = vmatpush.bf16.msra.mxu0 %v566
    %623 = vmatpush.bf16.msra.mxu0 %v562
    %624 = vmatpush.bf16.msra.mxu0 %v558
    %625 = vmatpush.bf16.msra.mxu0 %v554
    %626 = vmatmul.bf16.gmra.mxu0 %v457
    %v627 = vpop.f32.mrf.mxu0
    %v628 = vadd.f32 0.0, %v627
    %v629 = vpop.f32.mrf.mxu0
    %630 = vdwg.mxu0
    %631 = vmatpush.bf16.msra.mxu0 %v583
    %632 = vmatpush.bf16.msra.mxu0 %v579
    %633 = vmatpush.bf16.msra.mxu0 %v575
    %634 = vmatpush.bf16.msra.mxu0 %v571
    %635 = vmatpush.bf16.msra.mxu0 %v567
    %636 = vmatpush.bf16.msra.mxu0 %v563
    %637 = vmatpush.bf16.msra.mxu0 %v559
    %638 = vmatpush.bf16.msra.mxu0 %v555
    %639 = vmatmul.bf16.gmra.mxu0 %v457
    %v640 = vpop.f32.mrf.mxu0
    %v641 = vadd.f32 0.0, %v640
    %v642 = vpop.f32.mrf.mxu0
    %643 = vdwg.mxu0
    %644 = vmatpush.bf16.msra.mxu0 %v584
    %645 = vmatpush.bf16.msra.mxu0 %v580
    %646 = vmatpush.bf16.msra.mxu0 %v576
    %647 = vmatpush.bf16.msra.mxu0 %v572
    %648 = vmatpush.bf16.msra.mxu0 %v568
    %649 = vmatpush.bf16.msra.mxu0 %v564
    %650 = vmatpush.bf16.msra.mxu0 %v560
    %651 = vmatpush.bf16.msra.mxu0 %v556
    %652 = vmatmul.bf16.gmra.mxu0 %v457
    %v653 = vpop.f32.mrf.mxu0
    %v654 = vadd.f32 0.0, %v653
    %v655 = vpop.f32.mrf.mxu0
    %656 = vdwg.mxu0
    %657 = vmatpush.bf16.msra.mxu0 %v585
    %658 = vmatpush.bf16.msra.mxu0 %v581
    %659 = vmatpush.bf16.msra.mxu0 %v577
    %660 = vmatpush.bf16.msra.mxu0 %v573
    %661 = vmatpush.bf16.msra.mxu0 %v569
    %662 = vmatpush.bf16.msra.mxu0 %v565
    %663 = vmatpush.bf16.msra.mxu0 %v561
    %664 = vmatpush.bf16.msra.mxu0 %v557
    %665 = vmatmul.bf16.gmra.mxu0 %v457
    %v666 = vpop.f32.mrf.mxu0
    %v667 = vadd.f32 0.0, %v666
    %v668 = vpop.f32.mrf.mxu0
    %669 = vdwg.mxu0
    %v670 = vadd.f32 %v453, %v628
    %v671 = vadd.f32 %v454, %v641
    %v672 = vadd.f32 %v455, %v654
    %v673 = vadd.f32 %v456, %v667
    %v674 = vxor.u32 %v670, 2147483648
    %v675 = vmul.f32 %v674, 1.442695
    %v676 = vpow.pop %v675
    %v677 = vadd.f32 %v676, 1.0
    %v678 = vrcp.pop %v677
    %v679 = vmul.f32 %v677, %v678
    %v680 = vsub.f32 1.0, %v679
    %v681 = vmul.f32 %v678, %v680
    %v682 = vadd.f32 %v678, %v681
    %vm683 = vweird.f32 %v677
    %vm684 = vweird.f32 %v678
    %vm685 = vmor %vm683, %vm684
    %v686 = vsel %vm685, %v678, %v682
    %v687 = vand.u32 2147483647, %v677
    %vm688 = vcmp.eq.f32.partialorder %v687, 8.507059e+37
    %v689 = vand.u32 %v677, 2147483648
    %v690 = vor.u32 1.1754944e-38, %v689
    %v691 = vsel %vm688, %v690, %v686
    %v692 = vmul.f32 1.0, %v691
    %v693 = vxor.u32 %v671, 2147483648
    %v694 = vmul.f32 %v693, 1.442695
    %v695 = vpow.pop %v694
    %v696 = vadd.f32 %v695, 1.0
    %v697 = vrcp.pop %v696
    %v698 = vmul.f32 %v696, %v697
    %v699 = vsub.f32 1.0, %v698
    %v700 = vmul.f32 %v697, %v699
    %v701 = vadd.f32 %v697, %v700
    %vm702 = vweird.f32 %v696
    %vm703 = vweird.f32 %v697
    %vm704 = vmor %vm702, %vm703
    %v705 = vsel %vm704, %v697, %v701
    %v706 = vand.u32 2147483647, %v696
    %vm707 = vcmp.eq.f32.partialorder %v706, 8.507059e+37
    %v708 = vand.u32 %v696, 2147483648
    %v709 = vor.u32 1.1754944e-38, %v708
    %v710 = vsel %vm707, %v709, %v705
    %v711 = vmul.f32 1.0, %v710
    %v712 = vtanh.pop %v672
    %v713 = vxor.u32 %v673, 2147483648
    %v714 = vmul.f32 %v713, 1.442695
    %v715 = vpow.pop %v714
    %v716 = vadd.f32 %v715, 1.0
    %v717 = vrcp.pop %v716
    %v718 = vmul.f32 %v716, %v717
    %v719 = vsub.f32 1.0, %v718
    %v720 = vmul.f32 %v717, %v719
    %v721 = vadd.f32 %v717, %v720
    %vm722 = vweird.f32 %v716
    %vm723 = vweird.f32 %v717
    %vm724 = vmor %vm722, %vm723
    %v725 = vsel %vm724, %v717, %v721
    %v726 = vand.u32 2147483647, %v716
    %vm727 = vcmp.eq.f32.partialorder %v726, 8.507059e+37
    %v728 = vand.u32 %v716, 2147483648
    %v729 = vor.u32 1.1754944e-38, %v728
    %v730 = vsel %vm727, %v729, %v725
    %v731 = vmul.f32 1.0, %v730
    %v732 = vmul.f32 %v711, %v452
    %v733 = vmul.f32 %v692, %v712
    %v734 = vadd.f32 %v732, %v733
    %v735 = vtanh.pop %v734
    %v736 = vmul.f32 %v731, %v735
    %v737 = vld [vmem:[#allocation2 + $0x20] sm:$0xff]
    %v738 = vld [vmem:[#allocation2 + $0x28] sm:$0xff]
    %v739 = vld [vmem:[#allocation2 + $0x30] sm:$0xff]
    %v740 = vld [vmem:[#allocation2 + $0x38] sm:$0xff]
    %v741 = vpack.c.bf16 %v736, %v736
    %742 = vmatpush.bf16.msra.mxu0 %v582
    %743 = vmatpush.bf16.msra.mxu0 %v578
    %744 = vmatpush.bf16.msra.mxu0 %v574
    %745 = vmatpush.bf16.msra.mxu0 %v570
    %746 = vmatpush.bf16.msra.mxu0 %v566
    %747 = vmatpush.bf16.msra.mxu0 %v562
    %748 = vmatpush.bf16.msra.mxu0 %v558
    %749 = vmatpush.bf16.msra.mxu0 %v554
    %750 = vmatmul.bf16.gmra.mxu0 %v741
    %v751 = vpop.f32.mrf.mxu0
    %v752 = vadd.f32 0.0, %v751
    %v753 = vpop.f32.mrf.mxu0
    %754 = vdwg.mxu0
    %755 = vmatpush.bf16.msra.mxu0 %v583
    %756 = vmatpush.bf16.msra.mxu0 %v579
    %757 = vmatpush.bf16.msra.mxu0 %v575
    %758 = vmatpush.bf16.msra.mxu0 %v571
    %759 = vmatpush.bf16.msra.mxu0 %v567
    %760 = vmatpush.bf16.msra.mxu0 %v563
    %761 = vmatpush.bf16.msra.mxu0 %v559
    %762 = vmatpush.bf16.msra.mxu0 %v555
    %763 = vmatmul.bf16.gmra.mxu0 %v741
    %v764 = vpop.f32.mrf.mxu0
    %v765 = vadd.f32 0.0, %v764
    %v766 = vpop.f32.mrf.mxu0
    %767 = vdwg.mxu0
    %768 = vmatpush.bf16.msra.mxu0 %v584
    %769 = vmatpush.bf16.msra.mxu0 %v580
    %770 = vmatpush.bf16.msra.mxu0 %v576
    %771 = vmatpush.bf16.msra.mxu0 %v572
    %772 = vmatpush.bf16.msra.mxu0 %v568
    %773 = vmatpush.bf16.msra.mxu0 %v564
    %774 = vmatpush.bf16.msra.mxu0 %v560
    %775 = vmatpush.bf16.msra.mxu0 %v556
    %776 = vmatmul.bf16.gmra.mxu0 %v741
    %v777 = vpop.f32.mrf.mxu0
    %v778 = vadd.f32 0.0, %v777
    %v779 = vpop.f32.mrf.mxu0
    %780 = vdwg.mxu0
    %781 = vmatpush.bf16.msra.mxu0 %v585
    %782 = vmatpush.bf16.msra.mxu0 %v581
    %783 = vmatpush.bf16.msra.mxu0 %v577
    %784 = vmatpush.bf16.msra.mxu0 %v573
    %785 = vmatpush.bf16.msra.mxu0 %v569
    %786 = vmatpush.bf16.msra.mxu0 %v565
    %787 = vmatpush.bf16.msra.mxu0 %v561
    %788 = vmatpush.bf16.msra.mxu0 %v557
    %789 = vmatmul.bf16.gmra.mxu0 %v741
    %v790 = vpop.f32.mrf.mxu0
    %v791 = vadd.f32 0.0, %v790
    %v792 = vpop.f32.mrf.mxu0
    %793 = vdwg.mxu0
    %v794 = vadd.f32 %v737, %v752
    %v795 = vadd.f32 %v738, %v765
    %v796 = vadd.f32 %v739, %v778
    %v797 = vadd.f32 %v740, %v791
    %v798 = vxor.u32 %v794, 2147483648
    %v799 = vmul.f32 %v798, 1.442695
    %v800 = vpow.pop %v799
    %v801 = vadd.f32 %v800, 1.0
    %v802 = vrcp.pop %v801
    %v803 = vmul.f32 %v801, %v802
    %v804 = vsub.f32 1.0, %v803
    %v805 = vmul.f32 %v802, %v804
    %v806 = vadd.f32 %v802, %v805
    %vm807 = vweird.f32 %v801
    %vm808 = vweird.f32 %v802
    %vm809 = vmor %vm807, %vm808
    %v810 = vsel %vm809, %v802, %v806
    %v811 = vand.u32 2147483647, %v801
    %vm812 = vcmp.eq.f32.partialorder %v811, 8.507059e+37
    %v813 = vand.u32 %v801, 2147483648
    %v814 = vor.u32 1.1754944e-38, %v813
    %v815 = vsel %vm812, %v814, %v810
    %v816 = vmul.f32 1.0, %v815
    %v817 = vxor.u32 %v795, 2147483648
    %v818 = vmul.f32 %v817, 1.442695
    %v819 = vpow.pop %v818
    %v820 = vadd.f32 %v819, 1.0
    %v821 = vrcp.pop %v820
    %v822 = vmul.f32 %v820, %v821
    %v823 = vsub.f32 1.0, %v822
    %v824 = vmul.f32 %v821, %v823
    %v825 = vadd.f32 %v821, %v824
    %vm826 = vweird.f32 %v820
    %vm827 = vweird.f32 %v821
    %vm828 = vmor %vm826, %vm827
    %v829 = vsel %vm828, %v821, %v825
    %v830 = vand.u32 2147483647, %v820
    %vm831 = vcmp.eq.f32.partialorder %v830, 8.507059e+37
    %v832 = vand.u32 %v820, 2147483648
    %v833 = vor.u32 1.1754944e-38, %v832
    %v834 = vsel %vm831, %v833, %v829
    %v835 = vmul.f32 1.0, %v834
    %v836 = vtanh.pop %v796
    %v837 = vxor.u32 %v797, 2147483648
    %v838 = vmul.f32 %v837, 1.442695
    %v839 = vpow.pop %v838
    %v840 = vadd.f32 %v839, 1.0
    %v841 = vrcp.pop %v840
    %v842 = vmul.f32 %v840, %v841
    %v843 = vsub.f32 1.0, %v842
    %v844 = vmul.f32 %v841, %v843
    %v845 = vadd.f32 %v841, %v844
    %vm846 = vweird.f32 %v840
    %vm847 = vweird.f32 %v841
    %vm848 = vmor %vm846, %vm847
    %v849 = vsel %vm848, %v841, %v845
    %v850 = vand.u32 2147483647, %v840
    %vm851 = vcmp.eq.f32.partialorder %v850, 8.507059e+37
    %v852 = vand.u32 %v840, 2147483648
    %v853 = vor.u32 1.1754944e-38, %v852
    %v854 = vsel %vm851, %v853, %v849
    %v855 = vmul.f32 1.0, %v854
    %v856 = vmul.f32 %v835, %v734
    %v857 = vmul.f32 %v816, %v836
    %v858 = vadd.f32 %v856, %v857
    %v859 = vtanh.pop %v858
    %v860 = vmul.f32 %v855, %v859
    %v861 = vld [vmem:[#allocation2 + $0x40] sm:$0xff]
    %v862 = vld [vmem:[#allocation2 + $0x48] sm:$0xff]
    %v863 = vld [vmem:[#allocation2 + $0x50] sm:$0xff]
    %v864 = vld [vmem:[#allocation2 + $0x58] sm:$0xff]
    %v865 = vpack.c.bf16 %v860, %v860
    %866 = vmatpush.bf16.msra.mxu0 %v582
    %867 = vmatpush.bf16.msra.mxu0 %v578
    %868 = vmatpush.bf16.msra.mxu0 %v574
    %869 = vmatpush.bf16.msra.mxu0 %v570
    %870 = vmatpush.bf16.msra.mxu0 %v566
    %871 = vmatpush.bf16.msra.mxu0 %v562
    %872 = vmatpush.bf16.msra.mxu0 %v558
    %873 = vmatpush.bf16.msra.mxu0 %v554
    %874 = vmatmul.bf16.gmra.mxu0 %v865
    %v875 = vpop.f32.mrf.mxu0
    %v876 = vadd.f32 0.0, %v875
    %v877 = vpop.f32.mrf.mxu0
    %878 = vdwg.mxu0
    %879 = vmatpush.bf16.msra.mxu0 %v583
    %880 = vmatpush.bf16.msra.mxu0 %v579
    %881 = vmatpush.bf16.msra.mxu0 %v575
    %882 = vmatpush.bf16.msra.mxu0 %v571
    %883 = vmatpush.bf16.msra.mxu0 %v567
    %884 = vmatpush.bf16.msra.mxu0 %v563
    %885 = vmatpush.bf16.msra.mxu0 %v559
    %886 = vmatpush.bf16.msra.mxu0 %v555
    %887 = vmatmul.bf16.gmra.mxu0 %v865
    %v888 = vpop.f32.mrf.mxu0
    %v889 = vadd.f32 0.0, %v888
    %v890 = vpop.f32.mrf.mxu0
    %891 = vdwg.mxu0
    %892 = vmatpush.bf16.msra.mxu0 %v584
    %893 = vmatpush.bf16.msra.mxu0 %v580
    %894 = vmatpush.bf16.msra.mxu0 %v576
    %895 = vmatpush.bf16.msra.mxu0 %v572
    %896 = vmatpush.bf16.msra.mxu0 %v568
    %897 = vmatpush.bf16.msra.mxu0 %v564
    %898 = vmatpush.bf16.msra.mxu0 %v560
    %899 = vmatpush.bf16.msra.mxu0 %v556
    %900 = vmatmul.bf16.gmra.mxu0 %v865
    %v901 = vpop.f32.mrf.mxu0
    %v902 = vadd.f32 0.0, %v901
    %v903 = vpop.f32.mrf.mxu0
    %904 = vdwg.mxu0
    %905 = vmatpush.bf16.msra.mxu0 %v585
    %906 = vmatpush.bf16.msra.mxu0 %v581
    %907 = vmatpush.bf16.msra.mxu0 %v577
    %908 = vmatpush.bf16.msra.mxu0 %v573
    %909 = vmatpush.bf16.msra.mxu0 %v569
    %910 = vmatpush.bf16.msra.mxu0 %v565
    %911 = vmatpush.bf16.msra.mxu0 %v561
    %912 = vmatpush.bf16.msra.mxu0 %v557
    %913 = vmatmul.bf16.gmra.mxu0 %v865
    %v914 = vpop.f32.mrf.mxu0
    %v915 = vadd.f32 0.0, %v914
    %v916 = vpop.f32.mrf.mxu0
    %917 = vdwg.mxu0
    %v918 = vadd.f32 %v861, %v876
    %v919 = vadd.f32 %v862, %v889
    %v920 = vadd.f32 %v863, %v902
    %v921 = vadd.f32 %v864, %v915
    %v922 = vxor.u32 %v918, 2147483648
    %v923 = vmul.f32 %v922, 1.442695
    %v924 = vpow.pop %v923
    %v925 = vadd.f32 %v924, 1.0
    %v926 = vrcp.pop %v925
    %v927 = vmul.f32 %v925, %v926
    %v928 = vsub.f32 1.0, %v927
    %v929 = vmul.f32 %v926, %v928
    %v930 = vadd.f32 %v926, %v929
    %vm931 = vweird.f32 %v925
    %vm932 = vweird.f32 %v926
    %vm933 = vmor %vm931, %vm932
    %v934 = vsel %vm933, %v926, %v930
    %v935 = vand.u32 2147483647, %v925
    %vm936 = vcmp.eq.f32.partialorder %v935, 8.507059e+37
    %v937 = vand.u32 %v925, 2147483648
    %v938 = vor.u32 1.1754944e-38, %v937
    %v939 = vsel %vm936, %v938, %v934
    %v940 = vmul.f32 1.0, %v939
    %v941 = vxor.u32 %v919, 2147483648
    %v942 = vmul.f32 %v941, 1.442695
    %v943 = vpow.pop %v942
    %v944 = vadd.f32 %v943, 1.0
    %v945 = vrcp.pop %v944
    %v946 = vmul.f32 %v944, %v945
    %v947 = vsub.f32 1.0, %v946
    %v948 = vmul.f32 %v945, %v947
    %v949 = vadd.f32 %v945, %v948
    %vm950 = vweird.f32 %v944
    %vm951 = vweird.f32 %v945
    %vm952 = vmor %vm950, %vm951
    %v953 = vsel %vm952, %v945, %v949
    %v954 = vand.u32 2147483647, %v944
    %vm955 = vcmp.eq.f32.partialorder %v954, 8.507059e+37
    %v956 = vand.u32 %v944, 2147483648
    %v957 = vor.u32 1.1754944e-38, %v956
    %v958 = vsel %vm955, %v957, %v953
    %v959 = vmul.f32 1.0, %v958
    %v960 = vtanh.pop %v920
    %v961 = vxor.u32 %v921, 2147483648
    %v962 = vmul.f32 %v961, 1.442695
    %v963 = vpow.pop %v962
    %v964 = vadd.f32 %v963, 1.0
    %v965 = vrcp.pop %v964
    %v966 = vmul.f32 %v964, %v965
    %v967 = vsub.f32 1.0, %v966
    %v968 = vmul.f32 %v965, %v967
    %v969 = vadd.f32 %v965, %v968
    %vm970 = vweird.f32 %v964
    %vm971 = vweird.f32 %v965
    %vm972 = vmor %vm970, %vm971
    %v973 = vsel %vm972, %v965, %v969
    %v974 = vand.u32 2147483647, %v964
    %vm975 = vcmp.eq.f32.partialorder %v974, 8.507059e+37
    %v976 = vand.u32 %v964, 2147483648
    %v977 = vor.u32 1.1754944e-38, %v976
    %v978 = vsel %vm975, %v977, %v973
    %v979 = vmul.f32 1.0, %v978
    %v980 = vmul.f32 %v959, %v858
    %v981 = vmul.f32 %v940, %v960
    %v982 = vadd.f32 %v980, %v981
    %v983 = vtanh.pop %v982
    %v984 = vmul.f32 %v979, %v983
    %v985 = vld [vmem:[#allocation2 + $0x60] sm:$0xff]
    %v986 = vld [vmem:[#allocation2 + $0x68] sm:$0xff]
    %v987 = vld [vmem:[#allocation2 + $0x70] sm:$0xff]
    %v988 = vld [vmem:[#allocation2 + $0x78] sm:$0xff]
    %v989 = vpack.c.bf16 %v984, %v984
    %990 = vmatpush.bf16.msra.mxu0 %v582
    %991 = vmatpush.bf16.msra.mxu0 %v578
    %992 = vmatpush.bf16.msra.mxu0 %v574
    %993 = vmatpush.bf16.msra.mxu0 %v570
    %994 = vmatpush.bf16.msra.mxu0 %v566
    %995 = vmatpush.bf16.msra.mxu0 %v562
    %996 = vmatpush.bf16.msra.mxu0 %v558
    %997 = vmatpush.bf16.msra.mxu0 %v554
    %998 = vmatmul.bf16.gmra.mxu0 %v989
    %v999 = vpop.f32.mrf.mxu0
    %v1000 = vadd.f32 0.0, %v999
    %v1001 = vpop.f32.mrf.mxu0
    %1002 = vdwg.mxu0
    %1003 = vmatpush.bf16.msra.mxu0 %v583
    %1004 = vmatpush.bf16.msra.mxu0 %v579
    %1005 = vmatpush.bf16.msra.mxu0 %v575
    %1006 = vmatpush.bf16.msra.mxu0 %v571
    %1007 = vmatpush.bf16.msra.mxu0 %v567
    %1008 = vmatpush.bf16.msra.mxu0 %v563
    %1009 = vmatpush.bf16.msra.mxu0 %v559
    %1010 = vmatpush.bf16.msra.mxu0 %v555
    %1011 = vmatmul.bf16.gmra.mxu0 %v989
    %v1012 = vpop.f32.mrf.mxu0
    %v1013 = vadd.f32 0.0, %v1012
    %v1014 = vpop.f32.mrf.mxu0
    %1015 = vdwg.mxu0
    %1016 = vmatpush.bf16.msra.mxu0 %v584
    %1017 = vmatpush.bf16.msra.mxu0 %v580
    %1018 = vmatpush.bf16.msra.mxu0 %v576
    %1019 = vmatpush.bf16.msra.mxu0 %v572
    %1020 = vmatpush.bf16.msra.mxu0 %v568
    %1021 = vmatpush.bf16.msra.mxu0 %v564
    %1022 = vmatpush.bf16.msra.mxu0 %v560
    %1023 = vmatpush.bf16.msra.mxu0 %v556
    %1024 = vmatmul.bf16.gmra.mxu0 %v989
    %v1025 = vpop.f32.mrf.mxu0
    %v1026 = vadd.f32 0.0, %v1025
    %v1027 = vpop.f32.mrf.mxu0
    %1028 = vdwg.mxu0
    %1029 = vmatpush.bf16.msra.mxu0 %v585
    %1030 = vmatpush.bf16.msra.mxu0 %v581
    %1031 = vmatpush.bf16.msra.mxu0 %v577
    %1032 = vmatpush.bf16.msra.mxu0 %v573
    %1033 = vmatpush.bf16.msra.mxu0 %v569
    %1034 = vmatpush.bf16.msra.mxu0 %v565
    %1035 = vmatpush.bf16.msra.mxu0 %v561
    %1036 = vmatpush.bf16.msra.mxu0 %v557
    %1037 = vmatmul.bf16.gmra.mxu0 %v989
    %v1038 = vpop.f32.mrf.mxu0
    %v1039 = vadd.f32 0.0, %v1038
    %v1040 = vpop.f32.mrf.mxu0
    %1041 = vdwg.mxu0
    %v1042 = vadd.f32 %v985, %v1000
    %v1043 = vadd.f32 %v986, %v1013
    %v1044 = vadd.f32 %v987, %v1026
    %v1045 = vadd.f32 %v988, %v1039
    %v1046 = vxor.u32 %v1042, 2147483648
    %v1047 = vmul.f32 %v1046, 1.442695
    %v1048 = vpow.pop %v1047
    %v1049 = vadd.f32 %v1048, 1.0
    %v1050 = vrcp.pop %v1049
    %v1051 = vmul.f32 %v1049, %v1050
    %v1052 = vsub.f32 1.0, %v1051
    %v1053 = vmul.f32 %v1050, %v1052
    %v1054 = vadd.f32 %v1050, %v1053
    %vm1055 = vweird.f32 %v1049
    %vm1056 = vweird.f32 %v1050
    %vm1057 = vmor %vm1055, %vm1056
    %v1058 = vsel %vm1057, %v1050, %v1054
    %v1059 = vand.u32 2147483647, %v1049
    %vm1060 = vcmp.eq.f32.partialorder %v1059, 8.507059e+37
    %v1061 = vand.u32 %v1049, 2147483648
    %v1062 = vor.u32 1.1754944e-38, %v1061
    %v1063 = vsel %vm1060, %v1062, %v1058
    %v1064 = vmul.f32 1.0, %v1063
    %v1065 = vxor.u32 %v1043, 2147483648
    %v1066 = vmul.f32 %v1065, 1.442695
    %v1067 = vpow.pop %v1066
    %v1068 = vadd.f32 %v1067, 1.0
    %v1069 = vrcp.pop %v1068
    %v1070 = vmul.f32 %v1068, %v1069
    %v1071 = vsub.f32 1.0, %v1070
    %v1072 = vmul.f32 %v1069, %v1071
    %v1073 = vadd.f32 %v1069, %v1072
    %vm1074 = vweird.f32 %v1068
    %vm1075 = vweird.f32 %v1069
    %vm1076 = vmor %vm1074, %vm1075
    %v1077 = vsel %vm1076, %v1069, %v1073
    %v1078 = vand.u32 2147483647, %v1068
    %vm1079 = vcmp.eq.f32.partialorder %v1078, 8.507059e+37
    %v1080 = vand.u32 %v1068, 2147483648
    %v1081 = vor.u32 1.1754944e-38, %v1080
    %v1082 = vsel %vm1079, %v1081, %v1077
    %v1083 = vmul.f32 1.0, %v1082
    %v1084 = vtanh.pop %v1044
    %v1085 = vxor.u32 %v1045, 2147483648
    %v1086 = vmul.f32 %v1085, 1.442695
    %v1087 = vpow.pop %v1086
    %v1088 = vadd.f32 %v1087, 1.0
    %v1089 = vrcp.pop %v1088
    %v1090 = vmul.f32 %v1088, %v1089
    %v1091 = vsub.f32 1.0, %v1090
    %v1092 = vmul.f32 %v1089, %v1091
    %v1093 = vadd.f32 %v1089, %v1092
    %vm1094 = vweird.f32 %v1088
    %vm1095 = vweird.f32 %v1089
    %vm1096 = vmor %vm1094, %vm1095
    %v1097 = vsel %vm1096, %v1089, %v1093
    %v1098 = vand.u32 2147483647, %v1088
    %vm1099 = vcmp.eq.f32.partialorder %v1098, 8.507059e+37
    %v1100 = vand.u32 %v1088, 2147483648
    %v1101 = vor.u32 1.1754944e-38, %v1100
    %v1102 = vsel %vm1099, %v1101, %v1097
    %v1103 = vmul.f32 1.0, %v1102
    %v1104 = vmul.f32 %v1083, %v982
    %v1105 = vmul.f32 %v1064, %v1084
    %v1106 = vadd.f32 %v1104, %v1105
    %v1107 = vtanh.pop %v1106
    %v1108 = vmul.f32 %v1103, %v1107
    %v1109 = vld [vmem:[#allocation2 + $0x80] sm:$0xff]
    %v1110 = vld [vmem:[#allocation2 + $0x88] sm:$0xff]
    %v1111 = vld [vmem:[#allocation2 + $0x90] sm:$0xff]
    %v1112 = vld [vmem:[#allocation2 + $0x98] sm:$0xff]
    %v1113 = vpack.c.bf16 %v1108, %v1108
    %1114 = vmatpush.bf16.msra.mxu0 %v582
    %1115 = vmatpush.bf16.msra.mxu0 %v578
    %1116 = vmatpush.bf16.msra.mxu0 %v574
    %1117 = vmatpush.bf16.msra.mxu0 %v570
    %1118 = vmatpush.bf16.msra.mxu0 %v566
    %1119 = vmatpush.bf16.msra.mxu0 %v562
    %1120 = vmatpush.bf16.msra.mxu0 %v558
    %1121 = vmatpush.bf16.msra.mxu0 %v554
    %1122 = vmatmul.bf16.gmra.mxu0 %v1113
    %v1123 = vpop.f32.mrf.mxu0
    %v1124 = vadd.f32 0.0, %v1123
    %v1125 = vpop.f32.mrf.mxu0
    %1126 = vdwg.mxu0
    %1127 = vmatpush.bf16.msra.mxu0 %v583
    %1128 = vmatpush.bf16.msra.mxu0 %v579
    %1129 = vmatpush.bf16.msra.mxu0 %v575
    %1130 = vmatpush.bf16.msra.mxu0 %v571
    %1131 = vmatpush.bf16.msra.mxu0 %v567
    %1132 = vmatpush.bf16.msra.mxu0 %v563
    %1133 = vmatpush.bf16.msra.mxu0 %v559
    %1134 = vmatpush.bf16.msra.mxu0 %v555
    %1135 = vmatmul.bf16.gmra.mxu0 %v1113
    %v1136 = vpop.f32.mrf.mxu0
    %v1137 = vadd.f32 0.0, %v1136
    %v1138 = vpop.f32.mrf.mxu0
    %1139 = vdwg.mxu0
    %1140 = vmatpush.bf16.msra.mxu0 %v584
    %1141 = vmatpush.bf16.msra.mxu0 %v580
    %1142 = vmatpush.bf16.msra.mxu0 %v576
    %1143 = vmatpush.bf16.msra.mxu0 %v572
    %1144 = vmatpush.bf16.msra.mxu0 %v568
    %1145 = vmatpush.bf16.msra.mxu0 %v564
    %1146 = vmatpush.bf16.msra.mxu0 %v560
    %1147 = vmatpush.bf16.msra.mxu0 %v556
    %1148 = vmatmul.bf16.gmra.mxu0 %v1113
    %v1149 = vpop.f32.mrf.mxu0
    %v1150 = vadd.f32 0.0, %v1149
    %v1151 = vpop.f32.mrf.mxu0
    %1152 = vdwg.mxu0
    %1153 = vmatpush.bf16.msra.mxu0 %v585
    %1154 = vmatpush.bf16.msra.mxu0 %v581
    %1155 = vmatpush.bf16.msra.mxu0 %v577
    %1156 = vmatpush.bf16.msra.mxu0 %v573
    %1157 = vmatpush.bf16.msra.mxu0 %v569
    %1158 = vmatpush.bf16.msra.mxu0 %v565
    %1159 = vmatpush.bf16.msra.mxu0 %v561
    %1160 = vmatpush.bf16.msra.mxu0 %v557
    %1161 = vmatmul.bf16.gmra.mxu0 %v1113
    %v1162 = vpop.f32.mrf.mxu0
    %v1163 = vadd.f32 0.0, %v1162
    %v1164 = vpop.f32.mrf.mxu0
    %1165 = vdwg.mxu0
    %v1166 = vadd.f32 %v1109, %v1124
    %v1167 = vadd.f32 %v1110, %v1137
    %v1168 = vadd.f32 %v1111, %v1150
    %v1169 = vadd.f32 %v1112, %v1163
    %v1170 = vxor.u32 %v1166, 2147483648
    %v1171 = vmul.f32 %v1170, 1.442695
    %v1172 = vpow.pop %v1171
    %v1173 = vadd.f32 %v1172, 1.0
    %v1174 = vrcp.pop %v1173
    %v1175 = vmul.f32 %v1173, %v1174
    %v1176 = vsub.f32 1.0, %v1175
    %v1177 = vmul.f32 %v1174, %v1176
    %v1178 = vadd.f32 %v1174, %v1177
    %vm1179 = vweird.f32 %v1173
    %vm1180 = vweird.f32 %v1174
    %vm1181 = vmor %vm1179, %vm1180
    %v1182 = vsel %vm1181, %v1174, %v1178
    %v1183 = vand.u32 2147483647, %v1173
    %vm1184 = vcmp.eq.f32.partialorder %v1183, 8.507059e+37
    %v1185 = vand.u32 %v1173, 2147483648
    %v1186 = vor.u32 1.1754944e-38, %v1185
    %v1187 = vsel %vm1184, %v1186, %v1182
    %v1188 = vmul.f32 1.0, %v1187
    %v1189 = vxor.u32 %v1167, 2147483648
    %v1190 = vmul.f32 %v1189, 1.442695
    %v1191 = vpow.pop %v1190
    %v1192 = vadd.f32 %v1191, 1.0
    %v1193 = vrcp.pop %v1192
    %v1194 = vmul.f32 %v1192, %v1193
    %v1195 = vsub.f32 1.0, %v1194
    %v1196 = vmul.f32 %v1193, %v1195
    %v1197 = vadd.f32 %v1193, %v1196
    %vm1198 = vweird.f32 %v1192
    %vm1199 = vweird.f32 %v1193
    %vm1200 = vmor %vm1198, %vm1199
    %v1201 = vsel %vm1200, %v1193, %v1197
    %v1202 = vand.u32 2147483647, %v1192
    %vm1203 = vcmp.eq.f32.partialorder %v1202, 8.507059e+37
    %v1204 = vand.u32 %v1192, 2147483648
    %v1205 = vor.u32 1.1754944e-38, %v1204
    %v1206 = vsel %vm1203, %v1205, %v1201
    %v1207 = vmul.f32 1.0, %v1206
    %v1208 = vtanh.pop %v1168
    %v1209 = vxor.u32 %v1169, 2147483648
    %v1210 = vmul.f32 %v1209, 1.442695
    %v1211 = vpow.pop %v1210
    %v1212 = vadd.f32 %v1211, 1.0
    %v1213 = vrcp.pop %v1212
    %v1214 = vmul.f32 %v1212, %v1213
    %v1215 = vsub.f32 1.0, %v1214
    %v1216 = vmul.f32 %v1213, %v1215
    %v1217 = vadd.f32 %v1213, %v1216
    %vm1218 = vweird.f32 %v1212
    %vm1219 = vweird.f32 %v1213
    %vm1220 = vmor %vm1218, %vm1219
    %v1221 = vsel %vm1220, %v1213, %v1217
    %v1222 = vand.u32 2147483647, %v1212
    %vm1223 = vcmp.eq.f32.partialorder %v1222, 8.507059e+37
    %v1224 = vand.u32 %v1212, 2147483648
    %v1225 = vor.u32 1.1754944e-38, %v1224
    %v1226 = vsel %vm1223, %v1225, %v1221
    %v1227 = vmul.f32 1.0, %v1226
    %v1228 = vmul.f32 %v1207, %v1106
    %v1229 = vmul.f32 %v1188, %v1208
    %v1230 = vadd.f32 %v1228, %v1229
    %v1231 = vtanh.pop %v1230
    %v1232 = vmul.f32 %v1227, %v1231
    %v1233 = vld [vmem:[#allocation2 + $0xa0] sm:$0xff]
    %v1234 = vld [vmem:[#allocation2 + $0xa8] sm:$0xff]
    %v1235 = vld [vmem:[#allocation2 + $0xb0] sm:$0xff]
    %v1236 = vld [vmem:[#allocation2 + $0xb8] sm:$0xff]
    %v1237 = vpack.c.bf16 %v1232, %v1232
    %1238 = vmatpush.bf16.msra.mxu0 %v582
    %1239 = vmatpush.bf16.msra.mxu0 %v578
    %1240 = vmatpush.bf16.msra.mxu0 %v574
    %1241 = vmatpush.bf16.msra.mxu0 %v570
    %1242 = vmatpush.bf16.msra.mxu0 %v566
    %1243 = vmatpush.bf16.msra.mxu0 %v562
    %1244 = vmatpush.bf16.msra.mxu0 %v558
    %1245 = vmatpush.bf16.msra.mxu0 %v554
    %1246 = vmatmul.bf16.gmra.mxu0 %v1237
    %v1247 = vpop.f32.mrf.mxu0
    %v1248 = vadd.f32 0.0, %v1247
    %v1249 = vpop.f32.mrf.mxu0
    %1250 = vdwg.mxu0
    %1251 = vmatpush.bf16.msra.mxu0 %v583
    %1252 = vmatpush.bf16.msra.mxu0 %v579
    %1253 = vmatpush.bf16.msra.mxu0 %v575
    %1254 = vmatpush.bf16.msra.mxu0 %v571
    %1255 = vmatpush.bf16.msra.mxu0 %v567
    %1256 = vmatpush.bf16.msra.mxu0 %v563
    %1257 = vmatpush.bf16.msra.mxu0 %v559
    %1258 = vmatpush.bf16.msra.mxu0 %v555
    %1259 = vmatmul.bf16.gmra.mxu0 %v1237
    %v1260 = vpop.f32.mrf.mxu0
    %v1261 = vadd.f32 0.0, %v1260
    %v1262 = vpop.f32.mrf.mxu0
    %1263 = vdwg.mxu0
    %1264 = vmatpush.bf16.msra.mxu0 %v584
    %1265 = vmatpush.bf16.msra.mxu0 %v580
    %1266 = vmatpush.bf16.msra.mxu0 %v576
    %1267 = vmatpush.bf16.msra.mxu0 %v572
    %1268 = vmatpush.bf16.msra.mxu0 %v568
    %1269 = vmatpush.bf16.msra.mxu0 %v564
    %1270 = vmatpush.bf16.msra.mxu0 %v560
    %1271 = vmatpush.bf16.msra.mxu0 %v556
    %1272 = vmatmul.bf16.gmra.mxu0 %v1237
    %v1273 = vpop.f32.mrf.mxu0
    %v1274 = vadd.f32 0.0, %v1273
    %v1275 = vpop.f32.mrf.mxu0
    %1276 = vdwg.mxu0
    %1277 = vmatpush.bf16.msra.mxu0 %v585
    %1278 = vmatpush.bf16.msra.mxu0 %v581
    %1279 = vmatpush.bf16.msra.mxu0 %v577
    %1280 = vmatpush.bf16.msra.mxu0 %v573
    %1281 = vmatpush.bf16.msra.mxu0 %v569
    %1282 = vmatpush.bf16.msra.mxu0 %v565
    %1283 = vmatpush.bf16.msra.mxu0 %v561
    %1284 = vmatpush.bf16.msra.mxu0 %v557
    %1285 = vmatmul.bf16.gmra.mxu0 %v1237
    %v1286 = vpop.f32.mrf.mxu0
    %v1287 = vadd.f32 0.0, %v1286
    %v1288 = vpop.f32.mrf.mxu0
    %1289 = vdwg.mxu0
    %v1290 = vadd.f32 %v1233, %v1248
    %v1291 = vadd.f32 %v1234, %v1261
    %v1292 = vadd.f32 %v1235, %v1274
    %v1293 = vadd.f32 %v1236, %v1287
    %v1294 = vxor.u32 %v1290, 2147483648
    %v1295 = vmul.f32 %v1294, 1.442695
    %v1296 = vpow.pop %v1295
    %v1297 = vadd.f32 %v1296, 1.0
    %v1298 = vrcp.pop %v1297
    %v1299 = vmul.f32 %v1297, %v1298
    %v1300 = vsub.f32 1.0, %v1299
    %v1301 = vmul.f32 %v1298, %v1300
    %v1302 = vadd.f32 %v1298, %v1301
    %vm1303 = vweird.f32 %v1297
    %vm1304 = vweird.f32 %v1298
    %vm1305 = vmor %vm1303, %vm1304
    %v1306 = vsel %vm1305, %v1298, %v1302
    %v1307 = vand.u32 2147483647, %v1297
    %vm1308 = vcmp.eq.f32.partialorder %v1307, 8.507059e+37
    %v1309 = vand.u32 %v1297, 2147483648
    %v1310 = vor.u32 1.1754944e-38, %v1309
    %v1311 = vsel %vm1308, %v1310, %v1306
    %v1312 = vmul.f32 1.0, %v1311
    %v1313 = vxor.u32 %v1291, 2147483648
    %v1314 = vmul.f32 %v1313, 1.442695
    %v1315 = vpow.pop %v1314
    %v1316 = vadd.f32 %v1315, 1.0
    %v1317 = vrcp.pop %v1316
    %v1318 = vmul.f32 %v1316, %v1317
    %v1319 = vsub.f32 1.0, %v1318
    %v1320 = vmul.f32 %v1317, %v1319
    %v1321 = vadd.f32 %v1317, %v1320
    %vm1322 = vweird.f32 %v1316
    %vm1323 = vweird.f32 %v1317
    %vm1324 = vmor %vm1322, %vm1323
    %v1325 = vsel %vm1324, %v1317, %v1321
    %v1326 = vand.u32 2147483647, %v1316
    %vm1327 = vcmp.eq.f32.partialorder %v1326, 8.507059e+37
    %v1328 = vand.u32 %v1316, 2147483648
    %v1329 = vor.u32 1.1754944e-38, %v1328
    %v1330 = vsel %vm1327, %v1329, %v1325
    %v1331 = vmul.f32 1.0, %v1330
    %v1332 = vtanh.pop %v1292
    %v1333 = vxor.u32 %v1293, 2147483648
    %v1334 = vmul.f32 %v1333, 1.442695
    %v1335 = vpow.pop %v1334
    %v1336 = vadd.f32 %v1335, 1.0
    %v1337 = vrcp.pop %v1336
    %v1338 = vmul.f32 %v1336, %v1337
    %v1339 = vsub.f32 1.0, %v1338
    %v1340 = vmul.f32 %v1337, %v1339
    %v1341 = vadd.f32 %v1337, %v1340
    %vm1342 = vweird.f32 %v1336
    %vm1343 = vweird.f32 %v1337
    %vm1344 = vmor %vm1342, %vm1343
    %v1345 = vsel %vm1344, %v1337, %v1341
    %v1346 = vand.u32 2147483647, %v1336
    %vm1347 = vcmp.eq.f32.partialorder %v1346, 8.507059e+37
    %v1348 = vand.u32 %v1336, 2147483648
    %v1349 = vor.u32 1.1754944e-38, %v1348
    %v1350 = vsel %vm1347, %v1349, %v1345
    %v1351 = vmul.f32 1.0, %v1350
    %v1352 = vmul.f32 %v1331, %v1230
    %v1353 = vmul.f32 %v1312, %v1332
    %v1354 = vadd.f32 %v1352, %v1353
    %v1355 = vtanh.pop %v1354
    %v1356 = vmul.f32 %v1351, %v1355
    %v1357 = vld [vmem:[#allocation2 + $0xc0] sm:$0xff]
    %v1358 = vld [vmem:[#allocation2 + $0xc8] sm:$0xff]
    %v1359 = vld [vmem:[#allocation2 + $0xd0] sm:$0xff]
    %v1360 = vld [vmem:[#allocation2 + $0xd8] sm:$0xff]
    %v1361 = vpack.c.bf16 %v1356, %v1356
    %1362 = vmatpush.bf16.msra.mxu0 %v582
    %1363 = vmatpush.bf16.msra.mxu0 %v578
    %1364 = vmatpush.bf16.msra.mxu0 %v574
    %1365 = vmatpush.bf16.msra.mxu0 %v570
    %1366 = vmatpush.bf16.msra.mxu0 %v566
    %1367 = vmatpush.bf16.msra.mxu0 %v562
    %1368 = vmatpush.bf16.msra.mxu0 %v558
    %1369 = vmatpush.bf16.msra.mxu0 %v554
    %1370 = vmatmul.bf16.gmra.mxu0 %v1361
    %v1371 = vpop.f32.mrf.mxu0
    %v1372 = vadd.f32 0.0, %v1371
    %v1373 = vpop.f32.mrf.mxu0
    %1374 = vdwg.mxu0
    %1375 = vmatpush.bf16.msra.mxu0 %v583
    %1376 = vmatpush.bf16.msra.mxu0 %v579
    %1377 = vmatpush.bf16.msra.mxu0 %v575
    %1378 = vmatpush.bf16.msra.mxu0 %v571
    %1379 = vmatpush.bf16.msra.mxu0 %v567
    %1380 = vmatpush.bf16.msra.mxu0 %v563
    %1381 = vmatpush.bf16.msra.mxu0 %v559
    %1382 = vmatpush.bf16.msra.mxu0 %v555
    %1383 = vmatmul.bf16.gmra.mxu0 %v1361
    %v1384 = vpop.f32.mrf.mxu0
    %v1385 = vadd.f32 0.0, %v1384
    %v1386 = vpop.f32.mrf.mxu0
    %1387 = vdwg.mxu0
    %1388 = vmatpush.bf16.msra.mxu0 %v584
    %1389 = vmatpush.bf16.msra.mxu0 %v580
    %1390 = vmatpush.bf16.msra.mxu0 %v576
    %1391 = vmatpush.bf16.msra.mxu0 %v572
    %1392 = vmatpush.bf16.msra.mxu0 %v568
    %1393 = vmatpush.bf16.msra.mxu0 %v564
    %1394 = vmatpush.bf16.msra.mxu0 %v560
    %1395 = vmatpush.bf16.msra.mxu0 %v556
    %1396 = vmatmul.bf16.gmra.mxu0 %v1361
    %v1397 = vpop.f32.mrf.mxu0
    %v1398 = vadd.f32 0.0, %v1397
    %v1399 = vpop.f32.mrf.mxu0
    %1400 = vdwg.mxu0
    %1401 = vmatpush.bf16.msra.mxu0 %v585
    %1402 = vmatpush.bf16.msra.mxu0 %v581
    %1403 = vmatpush.bf16.msra.mxu0 %v577
    %1404 = vmatpush.bf16.msra.mxu0 %v573
    %1405 = vmatpush.bf16.msra.mxu0 %v569
    %1406 = vmatpush.bf16.msra.mxu0 %v565
    %1407 = vmatpush.bf16.msra.mxu0 %v561
    %1408 = vmatpush.bf16.msra.mxu0 %v557
    %1409 = vmatmul.bf16.gmra.mxu0 %v1361
    %v1410 = vpop.f32.mrf.mxu0
    %v1411 = vadd.f32 0.0, %v1410
    %v1412 = vpop.f32.mrf.mxu0
    %1413 = vdwg.mxu0
    %v1414 = vadd.f32 %v1357, %v1372
    %v1415 = vadd.f32 %v1358, %v1385
    %v1416 = vadd.f32 %v1359, %v1398
    %v1417 = vadd.f32 %v1360, %v1411
    %v1418 = vxor.u32 %v1414, 2147483648
    %v1419 = vmul.f32 %v1418, 1.442695
    %v1420 = vpow.pop %v1419
    %v1421 = vadd.f32 %v1420, 1.0
    %v1422 = vrcp.pop %v1421
    %v1423 = vmul.f32 %v1421, %v1422
    %v1424 = vsub.f32 1.0, %v1423
    %v1425 = vmul.f32 %v1422, %v1424
    %v1426 = vadd.f32 %v1422, %v1425
    %vm1427 = vweird.f32 %v1421
    %vm1428 = vweird.f32 %v1422
    %vm1429 = vmor %vm1427, %vm1428
    %v1430 = vsel %vm1429, %v1422, %v1426
    %v1431 = vand.u32 2147483647, %v1421
    %vm1432 = vcmp.eq.f32.partialorder %v1431, 8.507059e+37
    %v1433 = vand.u32 %v1421, 2147483648
    %v1434 = vor.u32 1.1754944e-38, %v1433
    %v1435 = vsel %vm1432, %v1434, %v1430
    %v1436 = vmul.f32 1.0, %v1435
    %v1437 = vxor.u32 %v1415, 2147483648
    %v1438 = vmul.f32 %v1437, 1.442695
    %v1439 = vpow.pop %v1438
    %v1440 = vadd.f32 %v1439, 1.0
    %v1441 = vrcp.pop %v1440
    %v1442 = vmul.f32 %v1440, %v1441
    %v1443 = vsub.f32 1.0, %v1442
    %v1444 = vmul.f32 %v1441, %v1443
    %v1445 = vadd.f32 %v1441, %v1444
    %vm1446 = vweird.f32 %v1440
    %vm1447 = vweird.f32 %v1441
    %vm1448 = vmor %vm1446, %vm1447
    %v1449 = vsel %vm1448, %v1441, %v1445
    %v1450 = vand.u32 2147483647, %v1440
    %vm1451 = vcmp.eq.f32.partialorder %v1450, 8.507059e+37
    %v1452 = vand.u32 %v1440, 2147483648
    %v1453 = vor.u32 1.1754944e-38, %v1452
    %v1454 = vsel %vm1451, %v1453, %v1449
    %v1455 = vmul.f32 1.0, %v1454
    %v1456 = vtanh.pop %v1416
    %v1457 = vxor.u32 %v1417, 2147483648
    %v1458 = vmul.f32 %v1457, 1.442695
    %v1459 = vpow.pop %v1458
    %v1460 = vadd.f32 %v1459, 1.0
    %v1461 = vrcp.pop %v1460
    %v1462 = vmul.f32 %v1460, %v1461
    %v1463 = vsub.f32 1.0, %v1462
    %v1464 = vmul.f32 %v1461, %v1463
    %v1465 = vadd.f32 %v1461, %v1464
    %vm1466 = vweird.f32 %v1460
    %vm1467 = vweird.f32 %v1461
    %vm1468 = vmor %vm1466, %vm1467
    %v1469 = vsel %vm1468, %v1461, %v1465
    %v1470 = vand.u32 2147483647, %v1460
    %vm1471 = vcmp.eq.f32.partialorder %v1470, 8.507059e+37
    %v1472 = vand.u32 %v1460, 2147483648
    %v1473 = vor.u32 1.1754944e-38, %v1472
    %v1474 = vsel %vm1471, %v1473, %v1469
    %v1475 = vmul.f32 1.0, %v1474
    %v1476 = vmul.f32 %v1455, %v1354
    %v1477 = vmul.f32 %v1436, %v1456
    %v1478 = vadd.f32 %v1476, %v1477
    %v1479 = vtanh.pop %v1478
    %v1480 = vmul.f32 %v1475, %v1479
    %v1481 = vld [vmem:[#allocation2 + $0xe0] sm:$0xff]
    %v1482 = vld [vmem:[#allocation2 + $0xe8] sm:$0xff]
    %v1483 = vld [vmem:[#allocation2 + $0xf0] sm:$0xff]
    %v1484 = vld [vmem:[#allocation2 + $0xf8] sm:$0xff]
    %v1485 = vpack.c.bf16 %v1480, %v1480
    %1486 = vmatpush.bf16.msra.mxu0 %v582
    %1487 = vmatpush.bf16.msra.mxu0 %v578
    %1488 = vmatpush.bf16.msra.mxu0 %v574
    %1489 = vmatpush.bf16.msra.mxu0 %v570
    %1490 = vmatpush.bf16.msra.mxu0 %v566
    %1491 = vmatpush.bf16.msra.mxu0 %v562
    %1492 = vmatpush.bf16.msra.mxu0 %v558
    %1493 = vmatpush.bf16.msra.mxu0 %v554
    %1494 = vmatmul.bf16.gmra.mxu0 %v1485
    %v1495 = vpop.f32.mrf.mxu0
    %v1496 = vadd.f32 0.0, %v1495
    %v1497 = vpop.f32.mrf.mxu0
    %1498 = vdwg.mxu0
    %1499 = vmatpush.bf16.msra.mxu0 %v583
    %1500 = vmatpush.bf16.msra.mxu0 %v579
    %1501 = vmatpush.bf16.msra.mxu0 %v575
    %1502 = vmatpush.bf16.msra.mxu0 %v571
    %1503 = vmatpush.bf16.msra.mxu0 %v567
    %1504 = vmatpush.bf16.msra.mxu0 %v563
    %1505 = vmatpush.bf16.msra.mxu0 %v559
    %1506 = vmatpush.bf16.msra.mxu0 %v555
    %1507 = vmatmul.bf16.gmra.mxu0 %v1485
    %v1508 = vpop.f32.mrf.mxu0
    %v1509 = vadd.f32 0.0, %v1508
    %v1510 = vpop.f32.mrf.mxu0
    %1511 = vdwg.mxu0
    %1512 = vmatpush.bf16.msra.mxu0 %v584
    %1513 = vmatpush.bf16.msra.mxu0 %v580
    %1514 = vmatpush.bf16.msra.mxu0 %v576
    %1515 = vmatpush.bf16.msra.mxu0 %v572
    %1516 = vmatpush.bf16.msra.mxu0 %v568
    %1517 = vmatpush.bf16.msra.mxu0 %v564
    %1518 = vmatpush.bf16.msra.mxu0 %v560
    %1519 = vmatpush.bf16.msra.mxu0 %v556
    %1520 = vmatmul.bf16.gmra.mxu0 %v1485
    %v1521 = vpop.f32.mrf.mxu0
    %v1522 = vadd.f32 0.0, %v1521
    %v1523 = vpop.f32.mrf.mxu0
    %1524 = vdwg.mxu0
    %1525 = vmatpush.bf16.msra.mxu0 %v585
    %1526 = vmatpush.bf16.msra.mxu0 %v581
    %1527 = vmatpush.bf16.msra.mxu0 %v577
    %1528 = vmatpush.bf16.msra.mxu0 %v573
    %1529 = vmatpush.bf16.msra.mxu0 %v569
    %1530 = vmatpush.bf16.msra.mxu0 %v565
    %1531 = vmatpush.bf16.msra.mxu0 %v561
    %1532 = vmatpush.bf16.msra.mxu0 %v557
    %1533 = vmatmul.bf16.gmra.mxu0 %v1485
    %v1534 = vpop.f32.mrf.mxu0
    %v1535 = vadd.f32 0.0, %v1534
    %v1536 = vpop.f32.mrf.mxu0
    %1537 = vdwg.mxu0
    %v1538 = vadd.f32 %v1481, %v1496
    %v1539 = vadd.f32 %v1482, %v1509
    %v1540 = vadd.f32 %v1483, %v1522
    %v1541 = vadd.f32 %v1484, %v1535
    %v1542 = vxor.u32 %v1538, 2147483648
    %v1543 = vmul.f32 %v1542, 1.442695
    %v1544 = vpow.pop %v1543
    %v1545 = vadd.f32 %v1544, 1.0
    %v1546 = vrcp.pop %v1545
    %v1547 = vmul.f32 %v1545, %v1546
    %v1548 = vsub.f32 1.0, %v1547
    %v1549 = vmul.f32 %v1546, %v1548
    %v1550 = vadd.f32 %v1546, %v1549
    %vm1551 = vweird.f32 %v1545
    %vm1552 = vweird.f32 %v1546
    %vm1553 = vmor %vm1551, %vm1552
    %v1554 = vsel %vm1553, %v1546, %v1550
    %v1555 = vand.u32 2147483647, %v1545
    %vm1556 = vcmp.eq.f32.partialorder %v1555, 8.507059e+37
    %v1557 = vand.u32 %v1545, 2147483648
    %v1558 = vor.u32 1.1754944e-38, %v1557
    %v1559 = vsel %vm1556, %v1558, %v1554
    %v1560 = vmul.f32 1.0, %v1559
    %v1561 = vxor.u32 %v1539, 2147483648
    %v1562 = vmul.f32 %v1561, 1.442695
    %v1563 = vpow.pop %v1562
    %v1564 = vadd.f32 %v1563, 1.0
    %v1565 = vrcp.pop %v1564
    %v1566 = vmul.f32 %v1564, %v1565
    %v1567 = vsub.f32 1.0, %v1566
    %v1568 = vmul.f32 %v1565, %v1567
    %v1569 = vadd.f32 %v1565, %v1568
    %vm1570 = vweird.f32 %v1564
    %vm1571 = vweird.f32 %v1565
    %vm1572 = vmor %vm1570, %vm1571
    %v1573 = vsel %vm1572, %v1565, %v1569
    %v1574 = vand.u32 2147483647, %v1564
    %vm1575 = vcmp.eq.f32.partialorder %v1574, 8.507059e+37
    %v1576 = vand.u32 %v1564, 2147483648
    %v1577 = vor.u32 1.1754944e-38, %v1576
    %v1578 = vsel %vm1575, %v1577, %v1573
    %v1579 = vmul.f32 1.0, %v1578
    %v1580 = vtanh.pop %v1540
    %v1581 = vxor.u32 %v1541, 2147483648
    %v1582 = vmul.f32 %v1581, 1.442695
    %v1583 = vpow.pop %v1582
    %v1584 = vadd.f32 %v1583, 1.0
    %v1585 = vrcp.pop %v1584
    %v1586 = vmul.f32 %v1584, %v1585
    %v1587 = vsub.f32 1.0, %v1586
    %v1588 = vmul.f32 %v1585, %v1587
    %v1589 = vadd.f32 %v1585, %v1588
    %vm1590 = vweird.f32 %v1584
    %vm1591 = vweird.f32 %v1585
    %vm1592 = vmor %vm1590, %vm1591
    %v1593 = vsel %vm1592, %v1585, %v1589
    %v1594 = vand.u32 2147483647, %v1584
    %vm1595 = vcmp.eq.f32.partialorder %v1594, 8.507059e+37
    %v1596 = vand.u32 %v1584, 2147483648
    %v1597 = vor.u32 1.1754944e-38, %v1596
    %v1598 = vsel %vm1595, %v1597, %v1593
    %v1599 = vmul.f32 1.0, %v1598
    %v1600 = vmul.f32 %v1579, %v1478
    %v1601 = vmul.f32 %v1560, %v1580
    %v1602 = vadd.f32 %v1600, %v1601
    %v1603 = vtanh.pop %v1602
    %v1604 = vmul.f32 %v1599, %v1603
    %1605 = vst [vmem:[%s10] sm:$0xff] %v1604
    %1606 = vst [vmem:[%s11] sm:$0xff] %v1602
    %v1607 = vpack.c.bf16 %v1604, %v1604
    %v1608 = vld [vmem:[%s7] sm:$0xf]
    %v1609 = vld [vmem:[%s7 + $0x4] sm:$0xf]
    %v1610 = vld [vmem:[%s7 + $0x8] sm:$0xf]
    %v1611 = vld [vmem:[%s7 + $0xc] sm:$0xf]
    %v1612 = vld [vmem:[%s7 + $0x10] sm:$0xf]
    %v1613 = vld [vmem:[%s7 + $0x14] sm:$0xf]
    %v1614 = vld [vmem:[%s7 + $0x18] sm:$0xf]
    %v1615 = vld [vmem:[%s7 + $0x1c] sm:$0xf]
    %v1616 = vld [vmem:[%s7 + $0x20] sm:$0xf]
    %v1617 = vld [vmem:[%s7 + $0x24] sm:$0xf]
    %v1618 = vld [vmem:[%s7 + $0x28] sm:$0xf]
    %v1619 = vld [vmem:[%s7 + $0x2c] sm:$0xf]
    %v1620 = vld [vmem:[%s7 + $0x30] sm:$0xf]
    %v1621 = vld [vmem:[%s7 + $0x34] sm:$0xf]
    %v1622 = vld [vmem:[%s7 + $0x38] sm:$0xf]
    %v1623 = vld [vmem:[%s7 + $0x3c] sm:$0xf]
    %v1624 = vld [vmem:[%s8] sm:$0x1]
    %v1626 = vperm.slane %v1624, 0
    %v1644 = vunpack.c.l.b16 %v1608
    %v1645 = vunpack.c.l.b16 %v1609
    %v1646 = vunpack.c.l.b16 %v1610
    %v1647 = vunpack.c.l.b16 %v1611
    %v1648 = vunpack.c.l.b16 %v1612
    %v1649 = vunpack.c.l.b16 %v1613
    %v1650 = vunpack.c.l.b16 %v1614
    %v1651 = vunpack.c.l.b16 %v1615
    %v1652 = vunpack.c.l.b16 %v1616
    %v1653 = vunpack.c.l.b16 %v1617
    %v1654 = vunpack.c.l.b16 %v1618
    %v1655 = vunpack.c.l.b16 %v1619
    %v1656 = vunpack.c.l.b16 %v1620
    %v1657 = vunpack.c.l.b16 %v1621
    %v1658 = vunpack.c.l.b16 %v1622
    %v1659 = vunpack.c.l.b16 %v1623
    %v1660 = vpack.c.b16 %v1645, %v1644
    %v1661 = vpack.c.b16 %v1647, %v1646
    %v1662 = vpack.c.b16 %v1649, %v1648
    %v1663 = vpack.c.b16 %v1651, %v1650
    %v1664 = vpack.c.b16 %v1653, %v1652
    %v1665 = vpack.c.b16 %v1655, %v1654
    %v1666 = vpack.c.b16 %v1657, %v1656
    %v1667 = vpack.c.b16 %v1659, %v1658
    %1676 = vmatpush.bf16.msra.mxu0 %v1667
    %1677 = vmatpush.bf16.msra.mxu0 %v1666
    %1678 = vmatpush.bf16.msra.mxu0 %v1665
    %1679 = vmatpush.bf16.msra.mxu0 %v1664
    %1680 = vmatpush.bf16.msra.mxu0 %v1663
    %1681 = vmatpush.bf16.msra.mxu0 %v1662
    %1682 = vmatpush.bf16.msra.mxu0 %v1661
    %1683 = vmatpush.bf16.msra.mxu0 %v1660
    %1684 = vmatmul.bf16.gmra.mxu0 %v1607
    %v1685 = vpop.f32.mrf.mxu0
    %v1686 = vadd.f32 %v1626, %v1685
    %v1687 = vpop.f32.mrf.mxu0
    %1688 = vdwg.mxu0
    %1689 = vst [vmem:[%s9] sm:$0xff] %v1686
    // Predicated region
    $region46: #{forward.1} parent=1 // pred_check
      _
    $region47: #{forward.1} parent=1 // pred_check_branch
      %1691 = sbr.rel (0) target = $region49
    $region48: #{forward.1} parent=1 // pred_region
      _
    $region49: #{forward.1} parent=1 // pred_fallthru
      _
    // Predicated region
    $region50: #{forward.1} parent=1 // pred_check
      _
    $region51: #{forward.1} parent=1 // pred_check_branch
      %1693 = sbr.rel (0) target = $region53
    $region52: #{forward.1} parent=1 // pred_region
      _
    $region53: #{forward.1} parent=1 // pred_fallthru
      _
    // Predicated region
    $region54: #{forward.1} parent=1 // pred_check
      _
    $region55: #{forward.1} parent=1 // pred_check_branch
      %1695 = sbr.rel (0) target = $region57
    $region56: #{forward.1} parent=1 // pred_region
      _
    $region57: #{forward.1} parent=1 // pred_fallthru
      _
    // Predicated region
    $region58: #{forward.1} parent=1 // pred_check
      _
    $region59: #{forward.1} parent=1 // pred_check_branch
      %1697 = sbr.rel (0) target = $region61
    $region60: #{forward.1} parent=1 // pred_region
      _
    $region61: #{forward.1} parent=1 // pred_fallthru
      _
    // Predicated region
    $region62: #{forward.1} parent=1 // pred_check
      _
    $region63: #{forward.1} parent=1 // pred_check_branch
      %1699 = sbr.rel (0) target = $region65
    $region64: #{forward.1} parent=1 // pred_region
      _
    $region65: #{forward.1} parent=1 // pred_fallthru
      _
    // Predicated region
    $region66: #{forward.1} parent=1 // pred_check
      _
    $region67: #{forward.1} parent=1 // pred_check_branch
      %1701 = sbr.rel (0) target = $region69
    $region68: #{forward.1} parent=1 // pred_region
      _
    $region69: #{forward.1} parent=1 // pred_fallthru
      _
    %1702 = vsyncpa [#allocation4], 1
    %1703 = vsyncpa [#allocation6], 1

</llo_original>
